<compile_context>
chip_gen: v7x
topology: tpu7x:2x2x1
jax: 0.10.0
libtpu: 0.0.40
codegen_flags: <defaults>
</compile_context>

<pallas_src>
import functools

import jax
import jax.numpy as jnp
from jax.experimental import pallas as pl
from jax.experimental.pallas import tpu as pltpu


# ---------------------------------------------------------------------------
# Pallas kernel: fused DenseSigmoidFlow forward for one (8, TL) batch slab.
# Parameters arrive as a flat 1-D f32 SMEM array:
#   [ C0 (n_dim) | b0 (n_dim) |
#     for each middle layer: C (n_dim*n_dim, row-major) | b (n_dim) |
#     cL (n_dim) | bL (1) ]
# ---------------------------------------------------------------------------
def dsf_kernel(p_ref, x_ref, o_ref, *, n_mid, n_dim):
    def sigmoid(z):
        # single EUP tanh per activation slab (vs exp + divide = 2 EUP ops)
        return 0.5 * jnp.tanh(0.5 * z) + 0.5

    x = x_ref[...]                                   # (8, TL) batch slab

    off = 0
    # ---- layer 0 : 1 -> n_dim   (scalar coeff * slab + scalar bias)
    s = []
    for i in range(n_dim):
        c = p_ref[off + i]                           # scalar -> splat
        b = p_ref[off + n_dim + i]
        s.append(sigmoid(c * x + b))                 # (8, TL)
    off += 2 * n_dim

    # ---- fused middle layers : n_dim -> n_dim  (n_dim broadcast-FMAs each)
    for _ in range(n_mid):
        s_new = []
        for i in range(n_dim):
            row = off + i * n_dim
            acc = p_ref[row] * s[0] + p_ref[off + n_dim * n_dim + i]
            for k in range(1, n_dim):
                acc = acc + p_ref[row + k] * s[k]
            s_new.append(sigmoid(acc))
        off += n_dim * n_dim + n_dim
        s = s_new

    # ---- fused last layer : n_dim -> 1  (final w == softmax(1x1) == 1.0)
    acc = p_ref[off] * s[0] + p_ref[off + n_dim]
    for k in range(1, n_dim):
        acc = acc + p_ref[off + k] * s[k]
    o_ref[...] = sigmoid(acc)                        # (8, TL) dense store


# ---------------------------------------------------------------------------
# Parameter setup (deterministic, mirrors torch.randn init shapes).
# ---------------------------------------------------------------------------
def init_params(key, num_layers, n_dim):
    dims = [(1, n_dim)] + [(n_dim, n_dim)] * (num_layers - 2) + [(n_dim, 1)]
    params = []
    for (in_d, out_d) in dims:
        key, k1, k2, k3, k4 = jax.random.split(key, 5)
        unnormalized_w = jax.random.normal(k1, (out_d, out_d), jnp.float32)
        log_a = jax.random.normal(k2, (out_d, 1), jnp.float32)
        b = jax.random.normal(k3, (out_d, 1), jnp.float32)
        unnormalized_u = jax.random.normal(k4, (out_d, in_d), jnp.float32)
        params.append((unnormalized_w, log_a, b, unnormalized_u))
    return params


def _layer_mats(p):
    """Return (a*u, b, w) for one SigmoidLayer."""
    unw, log_a, b, unu = p
    a = jnp.exp(log_a)                       # (out, 1)
    u = jax.nn.softmax(unu, axis=1)          # (out, in)
    w = jax.nn.softmax(unw, axis=1)          # (out, out)
    return a * u, b, w


# ---------------------------------------------------------------------------
# Wrapper: parameter fusion + flat SMEM packing (plain JAX) + pallas_call.
# ---------------------------------------------------------------------------
def dense_sigmoid_flow(params, x, *, tl=256):
    num_layers = len(params)
    assert num_layers >= 2
    assert tl % 128 == 0
    n_dim = params[0][0].shape[0]            # out_dim of the first layer
    n_mid = num_layers - 2
    assert params[0][3].shape[1] == 1, "first layer must have in_dim == 1"
    # The final w_L = softmax(1x1) == 1.0 is dropped; this requires out_dim==1.
    assert params[-1][0].shape == (1, 1), "last layer must have out_dim == 1"

    # ---- input: flatten, pad to a multiple of the (8, tl) slab, batch on
    #      both sublanes and lanes (sublane- and lane-dense I/O tiles).
    x_flat = x.reshape(-1).astype(jnp.float32)
    B = x_flat.shape[0]
    slab = 8 * tl
    B_pad = ((B + slab - 1) // slab) * slab
    if B_pad != B:
        x_flat = jnp.pad(x_flat, (0, B_pad - B))
    xf = x_flat.reshape(8, B_pad // 8)

    # ---- fuse consecutive linear maps:  C_l = (a_l * u_l) @ w_{l-1}
    au0, b0, w_prev = _layer_mats(params[0])               # au0: (n_dim, 1)
    pieces = [au0.reshape(-1), b0.reshape(-1)]             # C0 | b0
    for p in params[1:-1]:
        au, b, w = _layer_mats(p)
        C = au @ w_prev                                     # (n_dim, n_dim)
        pieces.append(C.reshape(-1))                        # row-major
        pieces.append(b.reshape(-1))
        w_prev = w
    auL, bL, _wL = _layer_mats(params[-1])                  # _wL == [[1.0]]
    pieces.append((auL @ w_prev).reshape(-1))               # cL (n_dim,)
    pieces.append(bL.reshape(-1))                           # bL (1,)
    # Flat 1-D SMEM parameter block (pads only to the next pow2 bytes).
    params_flat = jnp.concatenate(pieces).astype(jnp.float32)

    kernel = functools.partial(dsf_kernel, n_mid=n_mid, n_dim=n_dim)

    out = pl.pallas_call(
        kernel,
        out_shape=jax.ShapeDtypeStruct((8, B_pad // 8), jnp.float32),
        grid=(B_pad // slab,),
        in_specs=[
            pl.BlockSpec(memory_space=pltpu.MemorySpace.SMEM),   # flat params
            pl.BlockSpec((8, tl), lambda i: (0, i)),             # x slab
        ],
        out_specs=pl.BlockSpec((8, tl), lambda i: (0, i)),
        compiler_params=pltpu.CompilerParams(
            dimension_semantics=("parallel",)),
    )(params_flat, xf)

    # Match torch output shape: (B, 1, 1)
    return out.reshape(-1)[:B].reshape(B, 1, 1)


# ---------------------------------------------------------------------------
# Pure-JAX reference (direct transcription of the PyTorch forward).
# ---------------------------------------------------------------------------
def ref_forward(params, x):
    x = x.reshape(-1, 1, 1).astype(jnp.float32)
    for (unw, log_a, b, unu) in params:
        a = jnp.exp(log_a)
        u = jax.nn.softmax(unu, axis=1)
        w = jax.nn.softmax(unw, axis=1)
        inner = jnp.matmul(a * u, x) + b
        out = jax.nn.sigmoid(inner)
        x = jnp.matmul(w, out)
    return x


if __name__ == "__main__":
    num_layers = 4
    n_dim = 8
    B = 8192          # -> grid = B / (8*tl) = 4 slabs (>= 2 per core on v7x)

    key = jax.random.PRNGKey(0)
    pkey, xkey = jax.random.split(key)
    params = init_params(pkey, num_layers, n_dim)
    x = jax.random.normal(xkey, (B,), jnp.float32)

    y = dense_sigmoid_flow(params, x, tl=256)
    y = jax.block_until_ready(y)

    y_ref = ref_forward(params, x)
    assert y.shape == y_ref.shape == (B, 1, 1)
    assert jnp.allclose(y, y_ref, rtol=1e-4, atol=5e-5), (
        float(jnp.max(jnp.abs(y - y_ref))))

    print("KERNEL_OK")
</pallas_src>

<mosaic_0001>
module attributes {stable_mosaic.version = 11 : i64} {
  func.func @dsf_kernel(%arg0: i32, %arg1: memref<169xf32, #tpu.memory_space<smem>>, %arg2: memref<8x256xf32, #tpu.memory_space<vmem>>, %arg3: memref<8x256xf32, #tpu.memory_space<vmem>>) attributes {dimension_semantics = [#tpu.dimension_semantics<parallel>], iteration_bounds = array<i64: 4>, scalar_prefetch = 0 : i64, scratch_operands = 0 : i64, tpu.core_type = #tpu.core_type<tc>, window_params = [{transform_indices = @transform_0, window_bounds = array<i64: 169>}, {transform_indices = @transform_1, window_bounds = array<i64: 8, 256>}, {transform_indices = @transform_2, window_bounds = array<i64: 8, 256>}]} {
    %c0 = arith.constant 0 : index
    %c0_0 = arith.constant 0 : index
    %0 = vector.load %arg2[%c0, %c0_0] : memref<8x256xf32, #tpu.memory_space<vmem>>, vector<8x256xf32>
    %c0_1 = arith.constant 0 : index
    %1 = memref.load %arg1[%c0_1] : memref<169xf32, #tpu.memory_space<smem>>
    %c8 = arith.constant 8 : index
    %2 = memref.load %arg1[%c8] : memref<169xf32, #tpu.memory_space<smem>>
    %3 = vector.broadcast %1 : f32 to vector<8x256xf32>
    %4 = arith.mulf %3, %0 : vector<8x256xf32>
    %5 = vector.broadcast %2 : f32 to vector<8x256xf32>
    %6 = arith.addf %4, %5 : vector<8x256xf32>
    %cst = arith.constant 5.000000e-01 : f32
    %7 = vector.broadcast %cst : f32 to vector<8x256xf32>
    %8 = arith.mulf %7, %6 : vector<8x256xf32>
    %9 = math.tanh %8 : vector<8x256xf32>
    %cst_2 = arith.constant 5.000000e-01 : f32
    %10 = vector.broadcast %cst_2 : f32 to vector<8x256xf32>
    %11 = arith.mulf %10, %9 : vector<8x256xf32>
    %cst_3 = arith.constant 5.000000e-01 : f32
    %12 = vector.broadcast %cst_3 : f32 to vector<8x256xf32>
    %13 = arith.addf %11, %12 : vector<8x256xf32>
    %c1 = arith.constant 1 : index
    %14 = memref.load %arg1[%c1] : memref<169xf32, #tpu.memory_space<smem>>
    %c9 = arith.constant 9 : index
    %15 = memref.load %arg1[%c9] : memref<169xf32, #tpu.memory_space<smem>>
    %16 = vector.broadcast %14 : f32 to vector<8x256xf32>
    %17 = arith.mulf %16, %0 : vector<8x256xf32>
    %18 = vector.broadcast %15 : f32 to vector<8x256xf32>
    %19 = arith.addf %17, %18 : vector<8x256xf32>
    %cst_4 = arith.constant 5.000000e-01 : f32
    %20 = vector.broadcast %cst_4 : f32 to vector<8x256xf32>
    %21 = arith.mulf %20, %19 : vector<8x256xf32>
    %22 = math.tanh %21 : vector<8x256xf32>
    %cst_5 = arith.constant 5.000000e-01 : f32
    %23 = vector.broadcast %cst_5 : f32 to vector<8x256xf32>
    %24 = arith.mulf %23, %22 : vector<8x256xf32>
    %cst_6 = arith.constant 5.000000e-01 : f32
    %25 = vector.broadcast %cst_6 : f32 to vector<8x256xf32>
    %26 = arith.addf %24, %25 : vector<8x256xf32>
    %c2 = arith.constant 2 : index
    %27 = memref.load %arg1[%c2] : memref<169xf32, #tpu.memory_space<smem>>
    %c10 = arith.constant 10 : index
    %28 = memref.load %arg1[%c10] : memref<169xf32, #tpu.memory_space<smem>>
    %29 = vector.broadcast %27 : f32 to vector<8x256xf32>
    %30 = arith.mulf %29, %0 : vector<8x256xf32>
    %31 = vector.broadcast %28 : f32 to vector<8x256xf32>
    %32 = arith.addf %30, %31 : vector<8x256xf32>
    %cst_7 = arith.constant 5.000000e-01 : f32
    %33 = vector.broadcast %cst_7 : f32 to vector<8x256xf32>
    %34 = arith.mulf %33, %32 : vector<8x256xf32>
    %35 = math.tanh %34 : vector<8x256xf32>
    %cst_8 = arith.constant 5.000000e-01 : f32
    %36 = vector.broadcast %cst_8 : f32 to vector<8x256xf32>
    %37 = arith.mulf %36, %35 : vector<8x256xf32>
    %cst_9 = arith.constant 5.000000e-01 : f32
    %38 = vector.broadcast %cst_9 : f32 to vector<8x256xf32>
    %39 = arith.addf %37, %38 : vector<8x256xf32>
    %c3 = arith.constant 3 : index
    %40 = memref.load %arg1[%c3] : memref<169xf32, #tpu.memory_space<smem>>
    %c11 = arith.constant 11 : index
    %41 = memref.load %arg1[%c11] : memref<169xf32, #tpu.memory_space<smem>>
    %42 = vector.broadcast %40 : f32 to vector<8x256xf32>
    %43 = arith.mulf %42, %0 : vector<8x256xf32>
    %44 = vector.broadcast %41 : f32 to vector<8x256xf32>
    %45 = arith.addf %43, %44 : vector<8x256xf32>
    %cst_10 = arith.constant 5.000000e-01 : f32
    %46 = vector.broadcast %cst_10 : f32 to vector<8x256xf32>
    %47 = arith.mulf %46, %45 : vector<8x256xf32>
    %48 = math.tanh %47 : vector<8x256xf32>
    %cst_11 = arith.constant 5.000000e-01 : f32
    %49 = vector.broadcast %cst_11 : f32 to vector<8x256xf32>
    %50 = arith.mulf %49, %48 : vector<8x256xf32>
    %cst_12 = arith.constant 5.000000e-01 : f32
    %51 = vector.broadcast %cst_12 : f32 to vector<8x256xf32>
    %52 = arith.addf %50, %51 : vector<8x256xf32>
    %c4 = arith.constant 4 : index
    %53 = memref.load %arg1[%c4] : memref<169xf32, #tpu.memory_space<smem>>
    %c12 = arith.constant 12 : index
    %54 = memref.load %arg1[%c12] : memref<169xf32, #tpu.memory_space<smem>>
    %55 = vector.broadcast %53 : f32 to vector<8x256xf32>
    %56 = arith.mulf %55, %0 : vector<8x256xf32>
    %57 = vector.broadcast %54 : f32 to vector<8x256xf32>
    %58 = arith.addf %56, %57 : vector<8x256xf32>
    %cst_13 = arith.constant 5.000000e-01 : f32
    %59 = vector.broadcast %cst_13 : f32 to vector<8x256xf32>
    %60 = arith.mulf %59, %58 : vector<8x256xf32>
    %61 = math.tanh %60 : vector<8x256xf32>
    %cst_14 = arith.constant 5.000000e-01 : f32
    %62 = vector.broadcast %cst_14 : f32 to vector<8x256xf32>
    %63 = arith.mulf %62, %61 : vector<8x256xf32>
    %cst_15 = arith.constant 5.000000e-01 : f32
    %64 = vector.broadcast %cst_15 : f32 to vector<8x256xf32>
    %65 = arith.addf %63, %64 : vector<8x256xf32>
    %c5 = arith.constant 5 : index
    %66 = memref.load %arg1[%c5] : memref<169xf32, #tpu.memory_space<smem>>
    %c13 = arith.constant 13 : index
    %67 = memref.load %arg1[%c13] : memref<169xf32, #tpu.memory_space<smem>>
    %68 = vector.broadcast %66 : f32 to vector<8x256xf32>
    %69 = arith.mulf %68, %0 : vector<8x256xf32>
    %70 = vector.broadcast %67 : f32 to vector<8x256xf32>
    %71 = arith.addf %69, %70 : vector<8x256xf32>
    %cst_16 = arith.constant 5.000000e-01 : f32
    %72 = vector.broadcast %cst_16 : f32 to vector<8x256xf32>
    %73 = arith.mulf %72, %71 : vector<8x256xf32>
    %74 = math.tanh %73 : vector<8x256xf32>
    %cst_17 = arith.constant 5.000000e-01 : f32
    %75 = vector.broadcast %cst_17 : f32 to vector<8x256xf32>
    %76 = arith.mulf %75, %74 : vector<8x256xf32>
    %cst_18 = arith.constant 5.000000e-01 : f32
    %77 = vector.broadcast %cst_18 : f32 to vector<8x256xf32>
    %78 = arith.addf %76, %77 : vector<8x256xf32>
    %c6 = arith.constant 6 : index
    %79 = memref.load %arg1[%c6] : memref<169xf32, #tpu.memory_space<smem>>
    %c14 = arith.constant 14 : index
    %80 = memref.load %arg1[%c14] : memref<169xf32, #tpu.memory_space<smem>>
    %81 = vector.broadcast %79 : f32 to vector<8x256xf32>
    %82 = arith.mulf %81, %0 : vector<8x256xf32>
    %83 = vector.broadcast %80 : f32 to vector<8x256xf32>
    %84 = arith.addf %82, %83 : vector<8x256xf32>
    %cst_19 = arith.constant 5.000000e-01 : f32
    %85 = vector.broadcast %cst_19 : f32 to vector<8x256xf32>
    %86 = arith.mulf %85, %84 : vector<8x256xf32>
    %87 = math.tanh %86 : vector<8x256xf32>
    %cst_20 = arith.constant 5.000000e-01 : f32
    %88 = vector.broadcast %cst_20 : f32 to vector<8x256xf32>
    %89 = arith.mulf %88, %87 : vector<8x256xf32>
    %cst_21 = arith.constant 5.000000e-01 : f32
    %90 = vector.broadcast %cst_21 : f32 to vector<8x256xf32>
    %91 = arith.addf %89, %90 : vector<8x256xf32>
    %c7 = arith.constant 7 : index
    %92 = memref.load %arg1[%c7] : memref<169xf32, #tpu.memory_space<smem>>
    %c15 = arith.constant 15 : index
    %93 = memref.load %arg1[%c15] : memref<169xf32, #tpu.memory_space<smem>>
    %94 = vector.broadcast %92 : f32 to vector<8x256xf32>
    %95 = arith.mulf %94, %0 : vector<8x256xf32>
    %96 = vector.broadcast %93 : f32 to vector<8x256xf32>
    %97 = arith.addf %95, %96 : vector<8x256xf32>
    %cst_22 = arith.constant 5.000000e-01 : f32
    %98 = vector.broadcast %cst_22 : f32 to vector<8x256xf32>
    %99 = arith.mulf %98, %97 : vector<8x256xf32>
    %100 = math.tanh %99 : vector<8x256xf32>
    %cst_23 = arith.constant 5.000000e-01 : f32
    %101 = vector.broadcast %cst_23 : f32 to vector<8x256xf32>
    %102 = arith.mulf %101, %100 : vector<8x256xf32>
    %cst_24 = arith.constant 5.000000e-01 : f32
    %103 = vector.broadcast %cst_24 : f32 to vector<8x256xf32>
    %104 = arith.addf %102, %103 : vector<8x256xf32>
    %c16 = arith.constant 16 : index
    %105 = memref.load %arg1[%c16] : memref<169xf32, #tpu.memory_space<smem>>
    %106 = vector.broadcast %105 : f32 to vector<8x256xf32>
    %107 = arith.mulf %106, %13 : vector<8x256xf32>
    %c80 = arith.constant 80 : index
    %108 = memref.load %arg1[%c80] : memref<169xf32, #tpu.memory_space<smem>>
    %109 = vector.broadcast %108 : f32 to vector<8x256xf32>
    %110 = arith.addf %107, %109 : vector<8x256xf32>
    %c17 = arith.constant 17 : index
    %111 = memref.load %arg1[%c17] : memref<169xf32, #tpu.memory_space<smem>>
    %112 = vector.broadcast %111 : f32 to vector<8x256xf32>
    %113 = arith.mulf %112, %26 : vector<8x256xf32>
    %114 = arith.addf %110, %113 : vector<8x256xf32>
    %c18 = arith.constant 18 : index
    %115 = memref.load %arg1[%c18] : memref<169xf32, #tpu.memory_space<smem>>
    %116 = vector.broadcast %115 : f32 to vector<8x256xf32>
    %117 = arith.mulf %116, %39 : vector<8x256xf32>
    %118 = arith.addf %114, %117 : vector<8x256xf32>
    %c19 = arith.constant 19 : index
    %119 = memref.load %arg1[%c19] : memref<169xf32, #tpu.memory_space<smem>>
    %120 = vector.broadcast %119 : f32 to vector<8x256xf32>
    %121 = arith.mulf %120, %52 : vector<8x256xf32>
    %122 = arith.addf %118, %121 : vector<8x256xf32>
    %c20 = arith.constant 20 : index
    %123 = memref.load %arg1[%c20] : memref<169xf32, #tpu.memory_space<smem>>
    %124 = vector.broadcast %123 : f32 to vector<8x256xf32>
    %125 = arith.mulf %124, %65 : vector<8x256xf32>
    %126 = arith.addf %122, %125 : vector<8x256xf32>
    %c21 = arith.constant 21 : index
    %127 = memref.load %arg1[%c21] : memref<169xf32, #tpu.memory_space<smem>>
    %128 = vector.broadcast %127 : f32 to vector<8x256xf32>
    %129 = arith.mulf %128, %78 : vector<8x256xf32>
    %130 = arith.addf %126, %129 : vector<8x256xf32>
    %c22 = arith.constant 22 : index
    %131 = memref.load %arg1[%c22] : memref<169xf32, #tpu.memory_space<smem>>
    %132 = vector.broadcast %131 : f32 to vector<8x256xf32>
    %133 = arith.mulf %132, %91 : vector<8x256xf32>
    %134 = arith.addf %130, %133 : vector<8x256xf32>
    %c23 = arith.constant 23 : index
    %135 = memref.load %arg1[%c23] : memref<169xf32, #tpu.memory_space<smem>>
    %136 = vector.broadcast %135 : f32 to vector<8x256xf32>
    %137 = arith.mulf %136, %104 : vector<8x256xf32>
    %138 = arith.addf %134, %137 : vector<8x256xf32>
    %cst_25 = arith.constant 5.000000e-01 : f32
    %139 = vector.broadcast %cst_25 : f32 to vector<8x256xf32>
    %140 = arith.mulf %139, %138 : vector<8x256xf32>
    %141 = math.tanh %140 : vector<8x256xf32>
    %cst_26 = arith.constant 5.000000e-01 : f32
    %142 = vector.broadcast %cst_26 : f32 to vector<8x256xf32>
    %143 = arith.mulf %142, %141 : vector<8x256xf32>
    %cst_27 = arith.constant 5.000000e-01 : f32
    %144 = vector.broadcast %cst_27 : f32 to vector<8x256xf32>
    %145 = arith.addf %143, %144 : vector<8x256xf32>
    %c24 = arith.constant 24 : index
    %146 = memref.load %arg1[%c24] : memref<169xf32, #tpu.memory_space<smem>>
    %147 = vector.broadcast %146 : f32 to vector<8x256xf32>
    %148 = arith.mulf %147, %13 : vector<8x256xf32>
    %c81 = arith.constant 81 : index
    %149 = memref.load %arg1[%c81] : memref<169xf32, #tpu.memory_space<smem>>
    %150 = vector.broadcast %149 : f32 to vector<8x256xf32>
    %151 = arith.addf %148, %150 : vector<8x256xf32>
    %c25 = arith.constant 25 : index
    %152 = memref.load %arg1[%c25] : memref<169xf32, #tpu.memory_space<smem>>
    %153 = vector.broadcast %152 : f32 to vector<8x256xf32>
    %154 = arith.mulf %153, %26 : vector<8x256xf32>
    %155 = arith.addf %151, %154 : vector<8x256xf32>
    %c26 = arith.constant 26 : index
    %156 = memref.load %arg1[%c26] : memref<169xf32, #tpu.memory_space<smem>>
    %157 = vector.broadcast %156 : f32 to vector<8x256xf32>
    %158 = arith.mulf %157, %39 : vector<8x256xf32>
    %159 = arith.addf %155, %158 : vector<8x256xf32>
    %c27 = arith.constant 27 : index
    %160 = memref.load %arg1[%c27] : memref<169xf32, #tpu.memory_space<smem>>
    %161 = vector.broadcast %160 : f32 to vector<8x256xf32>
    %162 = arith.mulf %161, %52 : vector<8x256xf32>
    %163 = arith.addf %159, %162 : vector<8x256xf32>
    %c28 = arith.constant 28 : index
    %164 = memref.load %arg1[%c28] : memref<169xf32, #tpu.memory_space<smem>>
    %165 = vector.broadcast %164 : f32 to vector<8x256xf32>
    %166 = arith.mulf %165, %65 : vector<8x256xf32>
    %167 = arith.addf %163, %166 : vector<8x256xf32>
    %c29 = arith.constant 29 : index
    %168 = memref.load %arg1[%c29] : memref<169xf32, #tpu.memory_space<smem>>
    %169 = vector.broadcast %168 : f32 to vector<8x256xf32>
    %170 = arith.mulf %169, %78 : vector<8x256xf32>
    %171 = arith.addf %167, %170 : vector<8x256xf32>
    %c30 = arith.constant 30 : index
    %172 = memref.load %arg1[%c30] : memref<169xf32, #tpu.memory_space<smem>>
    %173 = vector.broadcast %172 : f32 to vector<8x256xf32>
    %174 = arith.mulf %173, %91 : vector<8x256xf32>
    %175 = arith.addf %171, %174 : vector<8x256xf32>
    %c31 = arith.constant 31 : index
    %176 = memref.load %arg1[%c31] : memref<169xf32, #tpu.memory_space<smem>>
    %177 = vector.broadcast %176 : f32 to vector<8x256xf32>
    %178 = arith.mulf %177, %104 : vector<8x256xf32>
    %179 = arith.addf %175, %178 : vector<8x256xf32>
    %cst_28 = arith.constant 5.000000e-01 : f32
    %180 = vector.broadcast %cst_28 : f32 to vector<8x256xf32>
    %181 = arith.mulf %180, %179 : vector<8x256xf32>
    %182 = math.tanh %181 : vector<8x256xf32>
    %cst_29 = arith.constant 5.000000e-01 : f32
    %183 = vector.broadcast %cst_29 : f32 to vector<8x256xf32>
    %184 = arith.mulf %183, %182 : vector<8x256xf32>
    %cst_30 = arith.constant 5.000000e-01 : f32
    %185 = vector.broadcast %cst_30 : f32 to vector<8x256xf32>
    %186 = arith.addf %184, %185 : vector<8x256xf32>
    %c32 = arith.constant 32 : index
    %187 = memref.load %arg1[%c32] : memref<169xf32, #tpu.memory_space<smem>>
    %188 = vector.broadcast %187 : f32 to vector<8x256xf32>
    %189 = arith.mulf %188, %13 : vector<8x256xf32>
    %c82 = arith.constant 82 : index
    %190 = memref.load %arg1[%c82] : memref<169xf32, #tpu.memory_space<smem>>
    %191 = vector.broadcast %190 : f32 to vector<8x256xf32>
    %192 = arith.addf %189, %191 : vector<8x256xf32>
    %c33 = arith.constant 33 : index
    %193 = memref.load %arg1[%c33] : memref<169xf32, #tpu.memory_space<smem>>
    %194 = vector.broadcast %193 : f32 to vector<8x256xf32>
    %195 = arith.mulf %194, %26 : vector<8x256xf32>
    %196 = arith.addf %192, %195 : vector<8x256xf32>
    %c34 = arith.constant 34 : index
    %197 = memref.load %arg1[%c34] : memref<169xf32, #tpu.memory_space<smem>>
    %198 = vector.broadcast %197 : f32 to vector<8x256xf32>
    %199 = arith.mulf %198, %39 : vector<8x256xf32>
    %200 = arith.addf %196, %199 : vector<8x256xf32>
    %c35 = arith.constant 35 : index
    %201 = memref.load %arg1[%c35] : memref<169xf32, #tpu.memory_space<smem>>
    %202 = vector.broadcast %201 : f32 to vector<8x256xf32>
    %203 = arith.mulf %202, %52 : vector<8x256xf32>
    %204 = arith.addf %200, %203 : vector<8x256xf32>
    %c36 = arith.constant 36 : index
    %205 = memref.load %arg1[%c36] : memref<169xf32, #tpu.memory_space<smem>>
    %206 = vector.broadcast %205 : f32 to vector<8x256xf32>
    %207 = arith.mulf %206, %65 : vector<8x256xf32>
    %208 = arith.addf %204, %207 : vector<8x256xf32>
    %c37 = arith.constant 37 : index
    %209 = memref.load %arg1[%c37] : memref<169xf32, #tpu.memory_space<smem>>
    %210 = vector.broadcast %209 : f32 to vector<8x256xf32>
    %211 = arith.mulf %210, %78 : vector<8x256xf32>
    %212 = arith.addf %208, %211 : vector<8x256xf32>
    %c38 = arith.constant 38 : index
    %213 = memref.load %arg1[%c38] : memref<169xf32, #tpu.memory_space<smem>>
    %214 = vector.broadcast %213 : f32 to vector<8x256xf32>
    %215 = arith.mulf %214, %91 : vector<8x256xf32>
    %216 = arith.addf %212, %215 : vector<8x256xf32>
    %c39 = arith.constant 39 : index
    %217 = memref.load %arg1[%c39] : memref<169xf32, #tpu.memory_space<smem>>
    %218 = vector.broadcast %217 : f32 to vector<8x256xf32>
    %219 = arith.mulf %218, %104 : vector<8x256xf32>
    %220 = arith.addf %216, %219 : vector<8x256xf32>
    %cst_31 = arith.constant 5.000000e-01 : f32
    %221 = vector.broadcast %cst_31 : f32 to vector<8x256xf32>
    %222 = arith.mulf %221, %220 : vector<8x256xf32>
    %223 = math.tanh %222 : vector<8x256xf32>
    %cst_32 = arith.constant 5.000000e-01 : f32
    %224 = vector.broadcast %cst_32 : f32 to vector<8x256xf32>
    %225 = arith.mulf %224, %223 : vector<8x256xf32>
    %cst_33 = arith.constant 5.000000e-01 : f32
    %226 = vector.broadcast %cst_33 : f32 to vector<8x256xf32>
    %227 = arith.addf %225, %226 : vector<8x256xf32>
    %c40 = arith.constant 40 : index
    %228 = memref.load %arg1[%c40] : memref<169xf32, #tpu.memory_space<smem>>
    %229 = vector.broadcast %228 : f32 to vector<8x256xf32>
    %230 = arith.mulf %229, %13 : vector<8x256xf32>
    %c83 = arith.constant 83 : index
    %231 = memref.load %arg1[%c83] : memref<169xf32, #tpu.memory_space<smem>>
    %232 = vector.broadcast %231 : f32 to vector<8x256xf32>
    %233 = arith.addf %230, %232 : vector<8x256xf32>
    %c41 = arith.constant 41 : index
    %234 = memref.load %arg1[%c41] : memref<169xf32, #tpu.memory_space<smem>>
    %235 = vector.broadcast %234 : f32 to vector<8x256xf32>
    %236 = arith.mulf %235, %26 : vector<8x256xf32>
    %237 = arith.addf %233, %236 : vector<8x256xf32>
    %c42 = arith.constant 42 : index
    %238 = memref.load %arg1[%c42] : memref<169xf32, #tpu.memory_space<smem>>
    %239 = vector.broadcast %238 : f32 to vector<8x256xf32>
    %240 = arith.mulf %239, %39 : vector<8x256xf32>
    %241 = arith.addf %237, %240 : vector<8x256xf32>
    %c43 = arith.constant 43 : index
    %242 = memref.load %arg1[%c43] : memref<169xf32, #tpu.memory_space<smem>>
    %243 = vector.broadcast %242 : f32 to vector<8x256xf32>
    %244 = arith.mulf %243, %52 : vector<8x256xf32>
    %245 = arith.addf %241, %244 : vector<8x256xf32>
    %c44 = arith.constant 44 : index
    %246 = memref.load %arg1[%c44] : memref<169xf32, #tpu.memory_space<smem>>
    %247 = vector.broadcast %246 : f32 to vector<8x256xf32>
    %248 = arith.mulf %247, %65 : vector<8x256xf32>
    %249 = arith.addf %245, %248 : vector<8x256xf32>
    %c45 = arith.constant 45 : index
    %250 = memref.load %arg1[%c45] : memref<169xf32, #tpu.memory_space<smem>>
    %251 = vector.broadcast %250 : f32 to vector<8x256xf32>
    %252 = arith.mulf %251, %78 : vector<8x256xf32>
    %253 = arith.addf %249, %252 : vector<8x256xf32>
    %c46 = arith.constant 46 : index
    %254 = memref.load %arg1[%c46] : memref<169xf32, #tpu.memory_space<smem>>
    %255 = vector.broadcast %254 : f32 to vector<8x256xf32>
    %256 = arith.mulf %255, %91 : vector<8x256xf32>
    %257 = arith.addf %253, %256 : vector<8x256xf32>
    %c47 = arith.constant 47 : index
    %258 = memref.load %arg1[%c47] : memref<169xf32, #tpu.memory_space<smem>>
    %259 = vector.broadcast %258 : f32 to vector<8x256xf32>
    %260 = arith.mulf %259, %104 : vector<8x256xf32>
    %261 = arith.addf %257, %260 : vector<8x256xf32>
    %cst_34 = arith.constant 5.000000e-01 : f32
    %262 = vector.broadcast %cst_34 : f32 to vector<8x256xf32>
    %263 = arith.mulf %262, %261 : vector<8x256xf32>
    %264 = math.tanh %263 : vector<8x256xf32>
    %cst_35 = arith.constant 5.000000e-01 : f32
    %265 = vector.broadcast %cst_35 : f32 to vector<8x256xf32>
    %266 = arith.mulf %265, %264 : vector<8x256xf32>
    %cst_36 = arith.constant 5.000000e-01 : f32
    %267 = vector.broadcast %cst_36 : f32 to vector<8x256xf32>
    %268 = arith.addf %266, %267 : vector<8x256xf32>
    %c48 = arith.constant 48 : index
    %269 = memref.load %arg1[%c48] : memref<169xf32, #tpu.memory_space<smem>>
    %270 = vector.broadcast %269 : f32 to vector<8x256xf32>
    %271 = arith.mulf %270, %13 : vector<8x256xf32>
    %c84 = arith.constant 84 : index
    %272 = memref.load %arg1[%c84] : memref<169xf32, #tpu.memory_space<smem>>
    %273 = vector.broadcast %272 : f32 to vector<8x256xf32>
    %274 = arith.addf %271, %273 : vector<8x256xf32>
    %c49 = arith.constant 49 : index
    %275 = memref.load %arg1[%c49] : memref<169xf32, #tpu.memory_space<smem>>
    %276 = vector.broadcast %275 : f32 to vector<8x256xf32>
    %277 = arith.mulf %276, %26 : vector<8x256xf32>
    %278 = arith.addf %274, %277 : vector<8x256xf32>
    %c50 = arith.constant 50 : index
    %279 = memref.load %arg1[%c50] : memref<169xf32, #tpu.memory_space<smem>>
    %280 = vector.broadcast %279 : f32 to vector<8x256xf32>
    %281 = arith.mulf %280, %39 : vector<8x256xf32>
    %282 = arith.addf %278, %281 : vector<8x256xf32>
    %c51 = arith.constant 51 : index
    %283 = memref.load %arg1[%c51] : memref<169xf32, #tpu.memory_space<smem>>
    %284 = vector.broadcast %283 : f32 to vector<8x256xf32>
    %285 = arith.mulf %284, %52 : vector<8x256xf32>
    %286 = arith.addf %282, %285 : vector<8x256xf32>
    %c52 = arith.constant 52 : index
    %287 = memref.load %arg1[%c52] : memref<169xf32, #tpu.memory_space<smem>>
    %288 = vector.broadcast %287 : f32 to vector<8x256xf32>
    %289 = arith.mulf %288, %65 : vector<8x256xf32>
    %290 = arith.addf %286, %289 : vector<8x256xf32>
    %c53 = arith.constant 53 : index
    %291 = memref.load %arg1[%c53] : memref<169xf32, #tpu.memory_space<smem>>
    %292 = vector.broadcast %291 : f32 to vector<8x256xf32>
    %293 = arith.mulf %292, %78 : vector<8x256xf32>
    %294 = arith.addf %290, %293 : vector<8x256xf32>
    %c54 = arith.constant 54 : index
    %295 = memref.load %arg1[%c54] : memref<169xf32, #tpu.memory_space<smem>>
    %296 = vector.broadcast %295 : f32 to vector<8x256xf32>
    %297 = arith.mulf %296, %91 : vector<8x256xf32>
    %298 = arith.addf %294, %297 : vector<8x256xf32>
    %c55 = arith.constant 55 : index
    %299 = memref.load %arg1[%c55] : memref<169xf32, #tpu.memory_space<smem>>
    %300 = vector.broadcast %299 : f32 to vector<8x256xf32>
    %301 = arith.mulf %300, %104 : vector<8x256xf32>
    %302 = arith.addf %298, %301 : vector<8x256xf32>
    %cst_37 = arith.constant 5.000000e-01 : f32
    %303 = vector.broadcast %cst_37 : f32 to vector<8x256xf32>
    %304 = arith.mulf %303, %302 : vector<8x256xf32>
    %305 = math.tanh %304 : vector<8x256xf32>
    %cst_38 = arith.constant 5.000000e-01 : f32
    %306 = vector.broadcast %cst_38 : f32 to vector<8x256xf32>
    %307 = arith.mulf %306, %305 : vector<8x256xf32>
    %cst_39 = arith.constant 5.000000e-01 : f32
    %308 = vector.broadcast %cst_39 : f32 to vector<8x256xf32>
    %309 = arith.addf %307, %308 : vector<8x256xf32>
    %c56 = arith.constant 56 : index
    %310 = memref.load %arg1[%c56] : memref<169xf32, #tpu.memory_space<smem>>
    %311 = vector.broadcast %310 : f32 to vector<8x256xf32>
    %312 = arith.mulf %311, %13 : vector<8x256xf32>
    %c85 = arith.constant 85 : index
    %313 = memref.load %arg1[%c85] : memref<169xf32, #tpu.memory_space<smem>>
    %314 = vector.broadcast %313 : f32 to vector<8x256xf32>
    %315 = arith.addf %312, %314 : vector<8x256xf32>
    %c57 = arith.constant 57 : index
    %316 = memref.load %arg1[%c57] : memref<169xf32, #tpu.memory_space<smem>>
    %317 = vector.broadcast %316 : f32 to vector<8x256xf32>
    %318 = arith.mulf %317, %26 : vector<8x256xf32>
    %319 = arith.addf %315, %318 : vector<8x256xf32>
    %c58 = arith.constant 58 : index
    %320 = memref.load %arg1[%c58] : memref<169xf32, #tpu.memory_space<smem>>
    %321 = vector.broadcast %320 : f32 to vector<8x256xf32>
    %322 = arith.mulf %321, %39 : vector<8x256xf32>
    %323 = arith.addf %319, %322 : vector<8x256xf32>
    %c59 = arith.constant 59 : index
    %324 = memref.load %arg1[%c59] : memref<169xf32, #tpu.memory_space<smem>>
    %325 = vector.broadcast %324 : f32 to vector<8x256xf32>
    %326 = arith.mulf %325, %52 : vector<8x256xf32>
    %327 = arith.addf %323, %326 : vector<8x256xf32>
    %c60 = arith.constant 60 : index
    %328 = memref.load %arg1[%c60] : memref<169xf32, #tpu.memory_space<smem>>
    %329 = vector.broadcast %328 : f32 to vector<8x256xf32>
    %330 = arith.mulf %329, %65 : vector<8x256xf32>
    %331 = arith.addf %327, %330 : vector<8x256xf32>
    %c61 = arith.constant 61 : index
    %332 = memref.load %arg1[%c61] : memref<169xf32, #tpu.memory_space<smem>>
    %333 = vector.broadcast %332 : f32 to vector<8x256xf32>
    %334 = arith.mulf %333, %78 : vector<8x256xf32>
    %335 = arith.addf %331, %334 : vector<8x256xf32>
    %c62 = arith.constant 62 : index
    %336 = memref.load %arg1[%c62] : memref<169xf32, #tpu.memory_space<smem>>
    %337 = vector.broadcast %336 : f32 to vector<8x256xf32>
    %338 = arith.mulf %337, %91 : vector<8x256xf32>
    %339 = arith.addf %335, %338 : vector<8x256xf32>
    %c63 = arith.constant 63 : index
    %340 = memref.load %arg1[%c63] : memref<169xf32, #tpu.memory_space<smem>>
    %341 = vector.broadcast %340 : f32 to vector<8x256xf32>
    %342 = arith.mulf %341, %104 : vector<8x256xf32>
    %343 = arith.addf %339, %342 : vector<8x256xf32>
    %cst_40 = arith.constant 5.000000e-01 : f32
    %344 = vector.broadcast %cst_40 : f32 to vector<8x256xf32>
    %345 = arith.mulf %344, %343 : vector<8x256xf32>
    %346 = math.tanh %345 : vector<8x256xf32>
    %cst_41 = arith.constant 5.000000e-01 : f32
    %347 = vector.broadcast %cst_41 : f32 to vector<8x256xf32>
    %348 = arith.mulf %347, %346 : vector<8x256xf32>
    %cst_42 = arith.constant 5.000000e-01 : f32
    %349 = vector.broadcast %cst_42 : f32 to vector<8x256xf32>
    %350 = arith.addf %348, %349 : vector<8x256xf32>
    %c64 = arith.constant 64 : index
    %351 = memref.load %arg1[%c64] : memref<169xf32, #tpu.memory_space<smem>>
    %352 = vector.broadcast %351 : f32 to vector<8x256xf32>
    %353 = arith.mulf %352, %13 : vector<8x256xf32>
    %c86 = arith.constant 86 : index
    %354 = memref.load %arg1[%c86] : memref<169xf32, #tpu.memory_space<smem>>
    %355 = vector.broadcast %354 : f32 to vector<8x256xf32>
    %356 = arith.addf %353, %355 : vector<8x256xf32>
    %c65 = arith.constant 65 : index
    %357 = memref.load %arg1[%c65] : memref<169xf32, #tpu.memory_space<smem>>
    %358 = vector.broadcast %357 : f32 to vector<8x256xf32>
    %359 = arith.mulf %358, %26 : vector<8x256xf32>
    %360 = arith.addf %356, %359 : vector<8x256xf32>
    %c66 = arith.constant 66 : index
    %361 = memref.load %arg1[%c66] : memref<169xf32, #tpu.memory_space<smem>>
    %362 = vector.broadcast %361 : f32 to vector<8x256xf32>
    %363 = arith.mulf %362, %39 : vector<8x256xf32>
    %364 = arith.addf %360, %363 : vector<8x256xf32>
    %c67 = arith.constant 67 : index
    %365 = memref.load %arg1[%c67] : memref<169xf32, #tpu.memory_space<smem>>
    %366 = vector.broadcast %365 : f32 to vector<8x256xf32>
    %367 = arith.mulf %366, %52 : vector<8x256xf32>
    %368 = arith.addf %364, %367 : vector<8x256xf32>
    %c68 = arith.constant 68 : index
    %369 = memref.load %arg1[%c68] : memref<169xf32, #tpu.memory_space<smem>>
    %370 = vector.broadcast %369 : f32 to vector<8x256xf32>
    %371 = arith.mulf %370, %65 : vector<8x256xf32>
    %372 = arith.addf %368, %371 : vector<8x256xf32>
    %c69 = arith.constant 69 : index
    %373 = memref.load %arg1[%c69] : memref<169xf32, #tpu.memory_space<smem>>
    %374 = vector.broadcast %373 : f32 to vector<8x256xf32>
    %375 = arith.mulf %374, %78 : vector<8x256xf32>
    %376 = arith.addf %372, %375 : vector<8x256xf32>
    %c70 = arith.constant 70 : index
    %377 = memref.load %arg1[%c70] : memref<169xf32, #tpu.memory_space<smem>>
    %378 = vector.broadcast %377 : f32 to vector<8x256xf32>
    %379 = arith.mulf %378, %91 : vector<8x256xf32>
    %380 = arith.addf %376, %379 : vector<8x256xf32>
    %c71 = arith.constant 71 : index
    %381 = memref.load %arg1[%c71] : memref<169xf32, #tpu.memory_space<smem>>
    %382 = vector.broadcast %381 : f32 to vector<8x256xf32>
    %383 = arith.mulf %382, %104 : vector<8x256xf32>
    %384 = arith.addf %380, %383 : vector<8x256xf32>
    %cst_43 = arith.constant 5.000000e-01 : f32
    %385 = vector.broadcast %cst_43 : f32 to vector<8x256xf32>
    %386 = arith.mulf %385, %384 : vector<8x256xf32>
    %387 = math.tanh %386 : vector<8x256xf32>
    %cst_44 = arith.constant 5.000000e-01 : f32
    %388 = vector.broadcast %cst_44 : f32 to vector<8x256xf32>
    %389 = arith.mulf %388, %387 : vector<8x256xf32>
    %cst_45 = arith.constant 5.000000e-01 : f32
    %390 = vector.broadcast %cst_45 : f32 to vector<8x256xf32>
    %391 = arith.addf %389, %390 : vector<8x256xf32>
    %c72 = arith.constant 72 : index
    %392 = memref.load %arg1[%c72] : memref<169xf32, #tpu.memory_space<smem>>
    %393 = vector.broadcast %392 : f32 to vector<8x256xf32>
    %394 = arith.mulf %393, %13 : vector<8x256xf32>
    %c87 = arith.constant 87 : index
    %395 = memref.load %arg1[%c87] : memref<169xf32, #tpu.memory_space<smem>>
    %396 = vector.broadcast %395 : f32 to vector<8x256xf32>
    %397 = arith.addf %394, %396 : vector<8x256xf32>
    %c73 = arith.constant 73 : index
    %398 = memref.load %arg1[%c73] : memref<169xf32, #tpu.memory_space<smem>>
    %399 = vector.broadcast %398 : f32 to vector<8x256xf32>
    %400 = arith.mulf %399, %26 : vector<8x256xf32>
    %401 = arith.addf %397, %400 : vector<8x256xf32>
    %c74 = arith.constant 74 : index
    %402 = memref.load %arg1[%c74] : memref<169xf32, #tpu.memory_space<smem>>
    %403 = vector.broadcast %402 : f32 to vector<8x256xf32>
    %404 = arith.mulf %403, %39 : vector<8x256xf32>
    %405 = arith.addf %401, %404 : vector<8x256xf32>
    %c75 = arith.constant 75 : index
    %406 = memref.load %arg1[%c75] : memref<169xf32, #tpu.memory_space<smem>>
    %407 = vector.broadcast %406 : f32 to vector<8x256xf32>
    %408 = arith.mulf %407, %52 : vector<8x256xf32>
    %409 = arith.addf %405, %408 : vector<8x256xf32>
    %c76 = arith.constant 76 : index
    %410 = memref.load %arg1[%c76] : memref<169xf32, #tpu.memory_space<smem>>
    %411 = vector.broadcast %410 : f32 to vector<8x256xf32>
    %412 = arith.mulf %411, %65 : vector<8x256xf32>
    %413 = arith.addf %409, %412 : vector<8x256xf32>
    %c77 = arith.constant 77 : index
    %414 = memref.load %arg1[%c77] : memref<169xf32, #tpu.memory_space<smem>>
    %415 = vector.broadcast %414 : f32 to vector<8x256xf32>
    %416 = arith.mulf %415, %78 : vector<8x256xf32>
    %417 = arith.addf %413, %416 : vector<8x256xf32>
    %c78 = arith.constant 78 : index
    %418 = memref.load %arg1[%c78] : memref<169xf32, #tpu.memory_space<smem>>
    %419 = vector.broadcast %418 : f32 to vector<8x256xf32>
    %420 = arith.mulf %419, %91 : vector<8x256xf32>
    %421 = arith.addf %417, %420 : vector<8x256xf32>
    %c79 = arith.constant 79 : index
    %422 = memref.load %arg1[%c79] : memref<169xf32, #tpu.memory_space<smem>>
    %423 = vector.broadcast %422 : f32 to vector<8x256xf32>
    %424 = arith.mulf %423, %104 : vector<8x256xf32>
    %425 = arith.addf %421, %424 : vector<8x256xf32>
    %cst_46 = arith.constant 5.000000e-01 : f32
    %426 = vector.broadcast %cst_46 : f32 to vector<8x256xf32>
    %427 = arith.mulf %426, %425 : vector<8x256xf32>
    %428 = math.tanh %427 : vector<8x256xf32>
    %cst_47 = arith.constant 5.000000e-01 : f32
    %429 = vector.broadcast %cst_47 : f32 to vector<8x256xf32>
    %430 = arith.mulf %429, %428 : vector<8x256xf32>
    %cst_48 = arith.constant 5.000000e-01 : f32
    %431 = vector.broadcast %cst_48 : f32 to vector<8x256xf32>
    %432 = arith.addf %430, %431 : vector<8x256xf32>
    %c88 = arith.constant 88 : index
    %433 = memref.load %arg1[%c88] : memref<169xf32, #tpu.memory_space<smem>>
    %434 = vector.broadcast %433 : f32 to vector<8x256xf32>
    %435 = arith.mulf %434, %145 : vector<8x256xf32>
    %c152 = arith.constant 152 : index
    %436 = memref.load %arg1[%c152] : memref<169xf32, #tpu.memory_space<smem>>
    %437 = vector.broadcast %436 : f32 to vector<8x256xf32>
    %438 = arith.addf %435, %437 : vector<8x256xf32>
    %c89 = arith.constant 89 : index
    %439 = memref.load %arg1[%c89] : memref<169xf32, #tpu.memory_space<smem>>
    %440 = vector.broadcast %439 : f32 to vector<8x256xf32>
    %441 = arith.mulf %440, %186 : vector<8x256xf32>
    %442 = arith.addf %438, %441 : vector<8x256xf32>
    %c90 = arith.constant 90 : index
    %443 = memref.load %arg1[%c90] : memref<169xf32, #tpu.memory_space<smem>>
    %444 = vector.broadcast %443 : f32 to vector<8x256xf32>
    %445 = arith.mulf %444, %227 : vector<8x256xf32>
    %446 = arith.addf %442, %445 : vector<8x256xf32>
    %c91 = arith.constant 91 : index
    %447 = memref.load %arg1[%c91] : memref<169xf32, #tpu.memory_space<smem>>
    %448 = vector.broadcast %447 : f32 to vector<8x256xf32>
    %449 = arith.mulf %448, %268 : vector<8x256xf32>
    %450 = arith.addf %446, %449 : vector<8x256xf32>
    %c92 = arith.constant 92 : index
    %451 = memref.load %arg1[%c92] : memref<169xf32, #tpu.memory_space<smem>>
    %452 = vector.broadcast %451 : f32 to vector<8x256xf32>
    %453 = arith.mulf %452, %309 : vector<8x256xf32>
    %454 = arith.addf %450, %453 : vector<8x256xf32>
    %c93 = arith.constant 93 : index
    %455 = memref.load %arg1[%c93] : memref<169xf32, #tpu.memory_space<smem>>
    %456 = vector.broadcast %455 : f32 to vector<8x256xf32>
    %457 = arith.mulf %456, %350 : vector<8x256xf32>
    %458 = arith.addf %454, %457 : vector<8x256xf32>
    %c94 = arith.constant 94 : index
    %459 = memref.load %arg1[%c94] : memref<169xf32, #tpu.memory_space<smem>>
    %460 = vector.broadcast %459 : f32 to vector<8x256xf32>
    %461 = arith.mulf %460, %391 : vector<8x256xf32>
    %462 = arith.addf %458, %461 : vector<8x256xf32>
    %c95 = arith.constant 95 : index
    %463 = memref.load %arg1[%c95] : memref<169xf32, #tpu.memory_space<smem>>
    %464 = vector.broadcast %463 : f32 to vector<8x256xf32>
    %465 = arith.mulf %464, %432 : vector<8x256xf32>
    %466 = arith.addf %462, %465 : vector<8x256xf32>
    %cst_49 = arith.constant 5.000000e-01 : f32
    %467 = vector.broadcast %cst_49 : f32 to vector<8x256xf32>
    %468 = arith.mulf %467, %466 : vector<8x256xf32>
    %469 = math.tanh %468 : vector<8x256xf32>
    %cst_50 = arith.constant 5.000000e-01 : f32
    %470 = vector.broadcast %cst_50 : f32 to vector<8x256xf32>
    %471 = arith.mulf %470, %469 : vector<8x256xf32>
    %cst_51 = arith.constant 5.000000e-01 : f32
    %472 = vector.broadcast %cst_51 : f32 to vector<8x256xf32>
    %473 = arith.addf %471, %472 : vector<8x256xf32>
    %c96 = arith.constant 96 : index
    %474 = memref.load %arg1[%c96] : memref<169xf32, #tpu.memory_space<smem>>
    %475 = vector.broadcast %474 : f32 to vector<8x256xf32>
    %476 = arith.mulf %475, %145 : vector<8x256xf32>
    %c153 = arith.constant 153 : index
    %477 = memref.load %arg1[%c153] : memref<169xf32, #tpu.memory_space<smem>>
    %478 = vector.broadcast %477 : f32 to vector<8x256xf32>
    %479 = arith.addf %476, %478 : vector<8x256xf32>
    %c97 = arith.constant 97 : index
    %480 = memref.load %arg1[%c97] : memref<169xf32, #tpu.memory_space<smem>>
    %481 = vector.broadcast %480 : f32 to vector<8x256xf32>
    %482 = arith.mulf %481, %186 : vector<8x256xf32>
    %483 = arith.addf %479, %482 : vector<8x256xf32>
    %c98 = arith.constant 98 : index
    %484 = memref.load %arg1[%c98] : memref<169xf32, #tpu.memory_space<smem>>
    %485 = vector.broadcast %484 : f32 to vector<8x256xf32>
    %486 = arith.mulf %485, %227 : vector<8x256xf32>
    %487 = arith.addf %483, %486 : vector<8x256xf32>
    %c99 = arith.constant 99 : index
    %488 = memref.load %arg1[%c99] : memref<169xf32, #tpu.memory_space<smem>>
    %489 = vector.broadcast %488 : f32 to vector<8x256xf32>
    %490 = arith.mulf %489, %268 : vector<8x256xf32>
    %491 = arith.addf %487, %490 : vector<8x256xf32>
    %c100 = arith.constant 100 : index
    %492 = memref.load %arg1[%c100] : memref<169xf32, #tpu.memory_space<smem>>
    %493 = vector.broadcast %492 : f32 to vector<8x256xf32>
    %494 = arith.mulf %493, %309 : vector<8x256xf32>
    %495 = arith.addf %491, %494 : vector<8x256xf32>
    %c101 = arith.constant 101 : index
    %496 = memref.load %arg1[%c101] : memref<169xf32, #tpu.memory_space<smem>>
    %497 = vector.broadcast %496 : f32 to vector<8x256xf32>
    %498 = arith.mulf %497, %350 : vector<8x256xf32>
    %499 = arith.addf %495, %498 : vector<8x256xf32>
    %c102 = arith.constant 102 : index
    %500 = memref.load %arg1[%c102] : memref<169xf32, #tpu.memory_space<smem>>
    %501 = vector.broadcast %500 : f32 to vector<8x256xf32>
    %502 = arith.mulf %501, %391 : vector<8x256xf32>
    %503 = arith.addf %499, %502 : vector<8x256xf32>
    %c103 = arith.constant 103 : index
    %504 = memref.load %arg1[%c103] : memref<169xf32, #tpu.memory_space<smem>>
    %505 = vector.broadcast %504 : f32 to vector<8x256xf32>
    %506 = arith.mulf %505, %432 : vector<8x256xf32>
    %507 = arith.addf %503, %506 : vector<8x256xf32>
    %cst_52 = arith.constant 5.000000e-01 : f32
    %508 = vector.broadcast %cst_52 : f32 to vector<8x256xf32>
    %509 = arith.mulf %508, %507 : vector<8x256xf32>
    %510 = math.tanh %509 : vector<8x256xf32>
    %cst_53 = arith.constant 5.000000e-01 : f32
    %511 = vector.broadcast %cst_53 : f32 to vector<8x256xf32>
    %512 = arith.mulf %511, %510 : vector<8x256xf32>
    %cst_54 = arith.constant 5.000000e-01 : f32
    %513 = vector.broadcast %cst_54 : f32 to vector<8x256xf32>
    %514 = arith.addf %512, %513 : vector<8x256xf32>
    %c104 = arith.constant 104 : index
    %515 = memref.load %arg1[%c104] : memref<169xf32, #tpu.memory_space<smem>>
    %516 = vector.broadcast %515 : f32 to vector<8x256xf32>
    %517 = arith.mulf %516, %145 : vector<8x256xf32>
    %c154 = arith.constant 154 : index
    %518 = memref.load %arg1[%c154] : memref<169xf32, #tpu.memory_space<smem>>
    %519 = vector.broadcast %518 : f32 to vector<8x256xf32>
    %520 = arith.addf %517, %519 : vector<8x256xf32>
    %c105 = arith.constant 105 : index
    %521 = memref.load %arg1[%c105] : memref<169xf32, #tpu.memory_space<smem>>
    %522 = vector.broadcast %521 : f32 to vector<8x256xf32>
    %523 = arith.mulf %522, %186 : vector<8x256xf32>
    %524 = arith.addf %520, %523 : vector<8x256xf32>
    %c106 = arith.constant 106 : index
    %525 = memref.load %arg1[%c106] : memref<169xf32, #tpu.memory_space<smem>>
    %526 = vector.broadcast %525 : f32 to vector<8x256xf32>
    %527 = arith.mulf %526, %227 : vector<8x256xf32>
    %528 = arith.addf %524, %527 : vector<8x256xf32>
    %c107 = arith.constant 107 : index
    %529 = memref.load %arg1[%c107] : memref<169xf32, #tpu.memory_space<smem>>
    %530 = vector.broadcast %529 : f32 to vector<8x256xf32>
    %531 = arith.mulf %530, %268 : vector<8x256xf32>
    %532 = arith.addf %528, %531 : vector<8x256xf32>
    %c108 = arith.constant 108 : index
    %533 = memref.load %arg1[%c108] : memref<169xf32, #tpu.memory_space<smem>>
    %534 = vector.broadcast %533 : f32 to vector<8x256xf32>
    %535 = arith.mulf %534, %309 : vector<8x256xf32>
    %536 = arith.addf %532, %535 : vector<8x256xf32>
    %c109 = arith.constant 109 : index
    %537 = memref.load %arg1[%c109] : memref<169xf32, #tpu.memory_space<smem>>
    %538 = vector.broadcast %537 : f32 to vector<8x256xf32>
    %539 = arith.mulf %538, %350 : vector<8x256xf32>
    %540 = arith.addf %536, %539 : vector<8x256xf32>
    %c110 = arith.constant 110 : index
    %541 = memref.load %arg1[%c110] : memref<169xf32, #tpu.memory_space<smem>>
    %542 = vector.broadcast %541 : f32 to vector<8x256xf32>
    %543 = arith.mulf %542, %391 : vector<8x256xf32>
    %544 = arith.addf %540, %543 : vector<8x256xf32>
    %c111 = arith.constant 111 : index
    %545 = memref.load %arg1[%c111] : memref<169xf32, #tpu.memory_space<smem>>
    %546 = vector.broadcast %545 : f32 to vector<8x256xf32>
    %547 = arith.mulf %546, %432 : vector<8x256xf32>
    %548 = arith.addf %544, %547 : vector<8x256xf32>
    %cst_55 = arith.constant 5.000000e-01 : f32
    %549 = vector.broadcast %cst_55 : f32 to vector<8x256xf32>
    %550 = arith.mulf %549, %548 : vector<8x256xf32>
    %551 = math.tanh %550 : vector<8x256xf32>
    %cst_56 = arith.constant 5.000000e-01 : f32
    %552 = vector.broadcast %cst_56 : f32 to vector<8x256xf32>
    %553 = arith.mulf %552, %551 : vector<8x256xf32>
    %cst_57 = arith.constant 5.000000e-01 : f32
    %554 = vector.broadcast %cst_57 : f32 to vector<8x256xf32>
    %555 = arith.addf %553, %554 : vector<8x256xf32>
    %c112 = arith.constant 112 : index
    %556 = memref.load %arg1[%c112] : memref<169xf32, #tpu.memory_space<smem>>
    %557 = vector.broadcast %556 : f32 to vector<8x256xf32>
    %558 = arith.mulf %557, %145 : vector<8x256xf32>
    %c155 = arith.constant 155 : index
    %559 = memref.load %arg1[%c155] : memref<169xf32, #tpu.memory_space<smem>>
    %560 = vector.broadcast %559 : f32 to vector<8x256xf32>
    %561 = arith.addf %558, %560 : vector<8x256xf32>
    %c113 = arith.constant 113 : index
    %562 = memref.load %arg1[%c113] : memref<169xf32, #tpu.memory_space<smem>>
    %563 = vector.broadcast %562 : f32 to vector<8x256xf32>
    %564 = arith.mulf %563, %186 : vector<8x256xf32>
    %565 = arith.addf %561, %564 : vector<8x256xf32>
    %c114 = arith.constant 114 : index
    %566 = memref.load %arg1[%c114] : memref<169xf32, #tpu.memory_space<smem>>
    %567 = vector.broadcast %566 : f32 to vector<8x256xf32>
    %568 = arith.mulf %567, %227 : vector<8x256xf32>
    %569 = arith.addf %565, %568 : vector<8x256xf32>
    %c115 = arith.constant 115 : index
    %570 = memref.load %arg1[%c115] : memref<169xf32, #tpu.memory_space<smem>>
    %571 = vector.broadcast %570 : f32 to vector<8x256xf32>
    %572 = arith.mulf %571, %268 : vector<8x256xf32>
    %573 = arith.addf %569, %572 : vector<8x256xf32>
    %c116 = arith.constant 116 : index
    %574 = memref.load %arg1[%c116] : memref<169xf32, #tpu.memory_space<smem>>
    %575 = vector.broadcast %574 : f32 to vector<8x256xf32>
    %576 = arith.mulf %575, %309 : vector<8x256xf32>
    %577 = arith.addf %573, %576 : vector<8x256xf32>
    %c117 = arith.constant 117 : index
    %578 = memref.load %arg1[%c117] : memref<169xf32, #tpu.memory_space<smem>>
    %579 = vector.broadcast %578 : f32 to vector<8x256xf32>
    %580 = arith.mulf %579, %350 : vector<8x256xf32>
    %581 = arith.addf %577, %580 : vector<8x256xf32>
    %c118 = arith.constant 118 : index
    %582 = memref.load %arg1[%c118] : memref<169xf32, #tpu.memory_space<smem>>
    %583 = vector.broadcast %582 : f32 to vector<8x256xf32>
    %584 = arith.mulf %583, %391 : vector<8x256xf32>
    %585 = arith.addf %581, %584 : vector<8x256xf32>
    %c119 = arith.constant 119 : index
    %586 = memref.load %arg1[%c119] : memref<169xf32, #tpu.memory_space<smem>>
    %587 = vector.broadcast %586 : f32 to vector<8x256xf32>
    %588 = arith.mulf %587, %432 : vector<8x256xf32>
    %589 = arith.addf %585, %588 : vector<8x256xf32>
    %cst_58 = arith.constant 5.000000e-01 : f32
    %590 = vector.broadcast %cst_58 : f32 to vector<8x256xf32>
    %591 = arith.mulf %590, %589 : vector<8x256xf32>
    %592 = math.tanh %591 : vector<8x256xf32>
    %cst_59 = arith.constant 5.000000e-01 : f32
    %593 = vector.broadcast %cst_59 : f32 to vector<8x256xf32>
    %594 = arith.mulf %593, %592 : vector<8x256xf32>
    %cst_60 = arith.constant 5.000000e-01 : f32
    %595 = vector.broadcast %cst_60 : f32 to vector<8x256xf32>
    %596 = arith.addf %594, %595 : vector<8x256xf32>
    %c120 = arith.constant 120 : index
    %597 = memref.load %arg1[%c120] : memref<169xf32, #tpu.memory_space<smem>>
    %598 = vector.broadcast %597 : f32 to vector<8x256xf32>
    %599 = arith.mulf %598, %145 : vector<8x256xf32>
    %c156 = arith.constant 156 : index
    %600 = memref.load %arg1[%c156] : memref<169xf32, #tpu.memory_space<smem>>
    %601 = vector.broadcast %600 : f32 to vector<8x256xf32>
    %602 = arith.addf %599, %601 : vector<8x256xf32>
    %c121 = arith.constant 121 : index
    %603 = memref.load %arg1[%c121] : memref<169xf32, #tpu.memory_space<smem>>
    %604 = vector.broadcast %603 : f32 to vector<8x256xf32>
    %605 = arith.mulf %604, %186 : vector<8x256xf32>
    %606 = arith.addf %602, %605 : vector<8x256xf32>
    %c122 = arith.constant 122 : index
    %607 = memref.load %arg1[%c122] : memref<169xf32, #tpu.memory_space<smem>>
    %608 = vector.broadcast %607 : f32 to vector<8x256xf32>
    %609 = arith.mulf %608, %227 : vector<8x256xf32>
    %610 = arith.addf %606, %609 : vector<8x256xf32>
    %c123 = arith.constant 123 : index
    %611 = memref.load %arg1[%c123] : memref<169xf32, #tpu.memory_space<smem>>
    %612 = vector.broadcast %611 : f32 to vector<8x256xf32>
    %613 = arith.mulf %612, %268 : vector<8x256xf32>
    %614 = arith.addf %610, %613 : vector<8x256xf32>
    %c124 = arith.constant 124 : index
    %615 = memref.load %arg1[%c124] : memref<169xf32, #tpu.memory_space<smem>>
    %616 = vector.broadcast %615 : f32 to vector<8x256xf32>
    %617 = arith.mulf %616, %309 : vector<8x256xf32>
    %618 = arith.addf %614, %617 : vector<8x256xf32>
    %c125 = arith.constant 125 : index
    %619 = memref.load %arg1[%c125] : memref<169xf32, #tpu.memory_space<smem>>
    %620 = vector.broadcast %619 : f32 to vector<8x256xf32>
    %621 = arith.mulf %620, %350 : vector<8x256xf32>
    %622 = arith.addf %618, %621 : vector<8x256xf32>
    %c126 = arith.constant 126 : index
    %623 = memref.load %arg1[%c126] : memref<169xf32, #tpu.memory_space<smem>>
    %624 = vector.broadcast %623 : f32 to vector<8x256xf32>
    %625 = arith.mulf %624, %391 : vector<8x256xf32>
    %626 = arith.addf %622, %625 : vector<8x256xf32>
    %c127 = arith.constant 127 : index
    %627 = memref.load %arg1[%c127] : memref<169xf32, #tpu.memory_space<smem>>
    %628 = vector.broadcast %627 : f32 to vector<8x256xf32>
    %629 = arith.mulf %628, %432 : vector<8x256xf32>
    %630 = arith.addf %626, %629 : vector<8x256xf32>
    %cst_61 = arith.constant 5.000000e-01 : f32
    %631 = vector.broadcast %cst_61 : f32 to vector<8x256xf32>
    %632 = arith.mulf %631, %630 : vector<8x256xf32>
    %633 = math.tanh %632 : vector<8x256xf32>
    %cst_62 = arith.constant 5.000000e-01 : f32
    %634 = vector.broadcast %cst_62 : f32 to vector<8x256xf32>
    %635 = arith.mulf %634, %633 : vector<8x256xf32>
    %cst_63 = arith.constant 5.000000e-01 : f32
    %636 = vector.broadcast %cst_63 : f32 to vector<8x256xf32>
    %637 = arith.addf %635, %636 : vector<8x256xf32>
    %c128 = arith.constant 128 : index
    %638 = memref.load %arg1[%c128] : memref<169xf32, #tpu.memory_space<smem>>
    %639 = vector.broadcast %638 : f32 to vector<8x256xf32>
    %640 = arith.mulf %639, %145 : vector<8x256xf32>
    %c157 = arith.constant 157 : index
    %641 = memref.load %arg1[%c157] : memref<169xf32, #tpu.memory_space<smem>>
    %642 = vector.broadcast %641 : f32 to vector<8x256xf32>
    %643 = arith.addf %640, %642 : vector<8x256xf32>
    %c129 = arith.constant 129 : index
    %644 = memref.load %arg1[%c129] : memref<169xf32, #tpu.memory_space<smem>>
    %645 = vector.broadcast %644 : f32 to vector<8x256xf32>
    %646 = arith.mulf %645, %186 : vector<8x256xf32>
    %647 = arith.addf %643, %646 : vector<8x256xf32>
    %c130 = arith.constant 130 : index
    %648 = memref.load %arg1[%c130] : memref<169xf32, #tpu.memory_space<smem>>
    %649 = vector.broadcast %648 : f32 to vector<8x256xf32>
    %650 = arith.mulf %649, %227 : vector<8x256xf32>
    %651 = arith.addf %647, %650 : vector<8x256xf32>
    %c131 = arith.constant 131 : index
    %652 = memref.load %arg1[%c131] : memref<169xf32, #tpu.memory_space<smem>>
    %653 = vector.broadcast %652 : f32 to vector<8x256xf32>
    %654 = arith.mulf %653, %268 : vector<8x256xf32>
    %655 = arith.addf %651, %654 : vector<8x256xf32>
    %c132 = arith.constant 132 : index
    %656 = memref.load %arg1[%c132] : memref<169xf32, #tpu.memory_space<smem>>
    %657 = vector.broadcast %656 : f32 to vector<8x256xf32>
    %658 = arith.mulf %657, %309 : vector<8x256xf32>
    %659 = arith.addf %655, %658 : vector<8x256xf32>
    %c133 = arith.constant 133 : index
    %660 = memref.load %arg1[%c133] : memref<169xf32, #tpu.memory_space<smem>>
    %661 = vector.broadcast %660 : f32 to vector<8x256xf32>
    %662 = arith.mulf %661, %350 : vector<8x256xf32>
    %663 = arith.addf %659, %662 : vector<8x256xf32>
    %c134 = arith.constant 134 : index
    %664 = memref.load %arg1[%c134] : memref<169xf32, #tpu.memory_space<smem>>
    %665 = vector.broadcast %664 : f32 to vector<8x256xf32>
    %666 = arith.mulf %665, %391 : vector<8x256xf32>
    %667 = arith.addf %663, %666 : vector<8x256xf32>
    %c135 = arith.constant 135 : index
    %668 = memref.load %arg1[%c135] : memref<169xf32, #tpu.memory_space<smem>>
    %669 = vector.broadcast %668 : f32 to vector<8x256xf32>
    %670 = arith.mulf %669, %432 : vector<8x256xf32>
    %671 = arith.addf %667, %670 : vector<8x256xf32>
    %cst_64 = arith.constant 5.000000e-01 : f32
    %672 = vector.broadcast %cst_64 : f32 to vector<8x256xf32>
    %673 = arith.mulf %672, %671 : vector<8x256xf32>
    %674 = math.tanh %673 : vector<8x256xf32>
    %cst_65 = arith.constant 5.000000e-01 : f32
    %675 = vector.broadcast %cst_65 : f32 to vector<8x256xf32>
    %676 = arith.mulf %675, %674 : vector<8x256xf32>
    %cst_66 = arith.constant 5.000000e-01 : f32
    %677 = vector.broadcast %cst_66 : f32 to vector<8x256xf32>
    %678 = arith.addf %676, %677 : vector<8x256xf32>
    %c136 = arith.constant 136 : index
    %679 = memref.load %arg1[%c136] : memref<169xf32, #tpu.memory_space<smem>>
    %680 = vector.broadcast %679 : f32 to vector<8x256xf32>
    %681 = arith.mulf %680, %145 : vector<8x256xf32>
    %c158 = arith.constant 158 : index
    %682 = memref.load %arg1[%c158] : memref<169xf32, #tpu.memory_space<smem>>
    %683 = vector.broadcast %682 : f32 to vector<8x256xf32>
    %684 = arith.addf %681, %683 : vector<8x256xf32>
    %c137 = arith.constant 137 : index
    %685 = memref.load %arg1[%c137] : memref<169xf32, #tpu.memory_space<smem>>
    %686 = vector.broadcast %685 : f32 to vector<8x256xf32>
    %687 = arith.mulf %686, %186 : vector<8x256xf32>
    %688 = arith.addf %684, %687 : vector<8x256xf32>
    %c138 = arith.constant 138 : index
    %689 = memref.load %arg1[%c138] : memref<169xf32, #tpu.memory_space<smem>>
    %690 = vector.broadcast %689 : f32 to vector<8x256xf32>
    %691 = arith.mulf %690, %227 : vector<8x256xf32>
    %692 = arith.addf %688, %691 : vector<8x256xf32>
    %c139 = arith.constant 139 : index
    %693 = memref.load %arg1[%c139] : memref<169xf32, #tpu.memory_space<smem>>
    %694 = vector.broadcast %693 : f32 to vector<8x256xf32>
    %695 = arith.mulf %694, %268 : vector<8x256xf32>
    %696 = arith.addf %692, %695 : vector<8x256xf32>
    %c140 = arith.constant 140 : index
    %697 = memref.load %arg1[%c140] : memref<169xf32, #tpu.memory_space<smem>>
    %698 = vector.broadcast %697 : f32 to vector<8x256xf32>
    %699 = arith.mulf %698, %309 : vector<8x256xf32>
    %700 = arith.addf %696, %699 : vector<8x256xf32>
    %c141 = arith.constant 141 : index
    %701 = memref.load %arg1[%c141] : memref<169xf32, #tpu.memory_space<smem>>
    %702 = vector.broadcast %701 : f32 to vector<8x256xf32>
    %703 = arith.mulf %702, %350 : vector<8x256xf32>
    %704 = arith.addf %700, %703 : vector<8x256xf32>
    %c142 = arith.constant 142 : index
    %705 = memref.load %arg1[%c142] : memref<169xf32, #tpu.memory_space<smem>>
    %706 = vector.broadcast %705 : f32 to vector<8x256xf32>
    %707 = arith.mulf %706, %391 : vector<8x256xf32>
    %708 = arith.addf %704, %707 : vector<8x256xf32>
    %c143 = arith.constant 143 : index
    %709 = memref.load %arg1[%c143] : memref<169xf32, #tpu.memory_space<smem>>
    %710 = vector.broadcast %709 : f32 to vector<8x256xf32>
    %711 = arith.mulf %710, %432 : vector<8x256xf32>
    %712 = arith.addf %708, %711 : vector<8x256xf32>
    %cst_67 = arith.constant 5.000000e-01 : f32
    %713 = vector.broadcast %cst_67 : f32 to vector<8x256xf32>
    %714 = arith.mulf %713, %712 : vector<8x256xf32>
    %715 = math.tanh %714 : vector<8x256xf32>
    %cst_68 = arith.constant 5.000000e-01 : f32
    %716 = vector.broadcast %cst_68 : f32 to vector<8x256xf32>
    %717 = arith.mulf %716, %715 : vector<8x256xf32>
    %cst_69 = arith.constant 5.000000e-01 : f32
    %718 = vector.broadcast %cst_69 : f32 to vector<8x256xf32>
    %719 = arith.addf %717, %718 : vector<8x256xf32>
    %c144 = arith.constant 144 : index
    %720 = memref.load %arg1[%c144] : memref<169xf32, #tpu.memory_space<smem>>
    %721 = vector.broadcast %720 : f32 to vector<8x256xf32>
    %722 = arith.mulf %721, %145 : vector<8x256xf32>
    %c159 = arith.constant 159 : index
    %723 = memref.load %arg1[%c159] : memref<169xf32, #tpu.memory_space<smem>>
    %724 = vector.broadcast %723 : f32 to vector<8x256xf32>
    %725 = arith.addf %722, %724 : vector<8x256xf32>
    %c145 = arith.constant 145 : index
    %726 = memref.load %arg1[%c145] : memref<169xf32, #tpu.memory_space<smem>>
    %727 = vector.broadcast %726 : f32 to vector<8x256xf32>
    %728 = arith.mulf %727, %186 : vector<8x256xf32>
    %729 = arith.addf %725, %728 : vector<8x256xf32>
    %c146 = arith.constant 146 : index
    %730 = memref.load %arg1[%c146] : memref<169xf32, #tpu.memory_space<smem>>
    %731 = vector.broadcast %730 : f32 to vector<8x256xf32>
    %732 = arith.mulf %731, %227 : vector<8x256xf32>
    %733 = arith.addf %729, %732 : vector<8x256xf32>
    %c147 = arith.constant 147 : index
    %734 = memref.load %arg1[%c147] : memref<169xf32, #tpu.memory_space<smem>>
    %735 = vector.broadcast %734 : f32 to vector<8x256xf32>
    %736 = arith.mulf %735, %268 : vector<8x256xf32>
    %737 = arith.addf %733, %736 : vector<8x256xf32>
    %c148 = arith.constant 148 : index
    %738 = memref.load %arg1[%c148] : memref<169xf32, #tpu.memory_space<smem>>
    %739 = vector.broadcast %738 : f32 to vector<8x256xf32>
    %740 = arith.mulf %739, %309 : vector<8x256xf32>
    %741 = arith.addf %737, %740 : vector<8x256xf32>
    %c149 = arith.constant 149 : index
    %742 = memref.load %arg1[%c149] : memref<169xf32, #tpu.memory_space<smem>>
    %743 = vector.broadcast %742 : f32 to vector<8x256xf32>
    %744 = arith.mulf %743, %350 : vector<8x256xf32>
    %745 = arith.addf %741, %744 : vector<8x256xf32>
    %c150 = arith.constant 150 : index
    %746 = memref.load %arg1[%c150] : memref<169xf32, #tpu.memory_space<smem>>
    %747 = vector.broadcast %746 : f32 to vector<8x256xf32>
    %748 = arith.mulf %747, %391 : vector<8x256xf32>
    %749 = arith.addf %745, %748 : vector<8x256xf32>
    %c151 = arith.constant 151 : index
    %750 = memref.load %arg1[%c151] : memref<169xf32, #tpu.memory_space<smem>>
    %751 = vector.broadcast %750 : f32 to vector<8x256xf32>
    %752 = arith.mulf %751, %432 : vector<8x256xf32>
    %753 = arith.addf %749, %752 : vector<8x256xf32>
    %cst_70 = arith.constant 5.000000e-01 : f32
    %754 = vector.broadcast %cst_70 : f32 to vector<8x256xf32>
    %755 = arith.mulf %754, %753 : vector<8x256xf32>
    %756 = math.tanh %755 : vector<8x256xf32>
    %cst_71 = arith.constant 5.000000e-01 : f32
    %757 = vector.broadcast %cst_71 : f32 to vector<8x256xf32>
    %758 = arith.mulf %757, %756 : vector<8x256xf32>
    %cst_72 = arith.constant 5.000000e-01 : f32
    %759 = vector.broadcast %cst_72 : f32 to vector<8x256xf32>
    %760 = arith.addf %758, %759 : vector<8x256xf32>
    %c160 = arith.constant 160 : index
    %761 = memref.load %arg1[%c160] : memref<169xf32, #tpu.memory_space<smem>>
    %762 = vector.broadcast %761 : f32 to vector<8x256xf32>
    %763 = arith.mulf %762, %473 : vector<8x256xf32>
    %c168 = arith.constant 168 : index
    %764 = memref.load %arg1[%c168] : memref<169xf32, #tpu.memory_space<smem>>
    %765 = vector.broadcast %764 : f32 to vector<8x256xf32>
    %766 = arith.addf %763, %765 : vector<8x256xf32>
    %c161 = arith.constant 161 : index
    %767 = memref.load %arg1[%c161] : memref<169xf32, #tpu.memory_space<smem>>
    %768 = vector.broadcast %767 : f32 to vector<8x256xf32>
    %769 = arith.mulf %768, %514 : vector<8x256xf32>
    %770 = arith.addf %766, %769 : vector<8x256xf32>
    %c162 = arith.constant 162 : index
    %771 = memref.load %arg1[%c162] : memref<169xf32, #tpu.memory_space<smem>>
    %772 = vector.broadcast %771 : f32 to vector<8x256xf32>
    %773 = arith.mulf %772, %555 : vector<8x256xf32>
    %774 = arith.addf %770, %773 : vector<8x256xf32>
    %c163 = arith.constant 163 : index
    %775 = memref.load %arg1[%c163] : memref<169xf32, #tpu.memory_space<smem>>
    %776 = vector.broadcast %775 : f32 to vector<8x256xf32>
    %777 = arith.mulf %776, %596 : vector<8x256xf32>
    %778 = arith.addf %774, %777 : vector<8x256xf32>
    %c164 = arith.constant 164 : index
    %779 = memref.load %arg1[%c164] : memref<169xf32, #tpu.memory_space<smem>>
    %780 = vector.broadcast %779 : f32 to vector<8x256xf32>
    %781 = arith.mulf %780, %637 : vector<8x256xf32>
    %782 = arith.addf %778, %781 : vector<8x256xf32>
    %c165 = arith.constant 165 : index
    %783 = memref.load %arg1[%c165] : memref<169xf32, #tpu.memory_space<smem>>
    %784 = vector.broadcast %783 : f32 to vector<8x256xf32>
    %785 = arith.mulf %784, %678 : vector<8x256xf32>
    %786 = arith.addf %782, %785 : vector<8x256xf32>
    %c166 = arith.constant 166 : index
    %787 = memref.load %arg1[%c166] : memref<169xf32, #tpu.memory_space<smem>>
    %788 = vector.broadcast %787 : f32 to vector<8x256xf32>
    %789 = arith.mulf %788, %719 : vector<8x256xf32>
    %790 = arith.addf %786, %789 : vector<8x256xf32>
    %c167 = arith.constant 167 : index
    %791 = memref.load %arg1[%c167] : memref<169xf32, #tpu.memory_space<smem>>
    %792 = vector.broadcast %791 : f32 to vector<8x256xf32>
    %793 = arith.mulf %792, %760 : vector<8x256xf32>
    %794 = arith.addf %790, %793 : vector<8x256xf32>
    %cst_73 = arith.constant 5.000000e-01 : f32
    %795 = vector.broadcast %cst_73 : f32 to vector<8x256xf32>
    %796 = arith.mulf %795, %794 : vector<8x256xf32>
    %797 = math.tanh %796 : vector<8x256xf32>
    %cst_74 = arith.constant 5.000000e-01 : f32
    %798 = vector.broadcast %cst_74 : f32 to vector<8x256xf32>
    %799 = arith.mulf %798, %797 : vector<8x256xf32>
    %cst_75 = arith.constant 5.000000e-01 : f32
    %800 = vector.broadcast %cst_75 : f32 to vector<8x256xf32>
    %801 = arith.addf %799, %800 : vector<8x256xf32>
    %c0_76 = arith.constant 0 : index
    %c0_77 = arith.constant 0 : index
    %802 = vector.load %arg3[%c0_76, %c0_77] : memref<8x256xf32, #tpu.memory_space<vmem>>, vector<8x256xf32>
    tpu.vector_store %arg3[%c0_76, %c0_77], %801 {strides = array<i32>} : memref<8x256xf32, #tpu.memory_space<vmem>>, vector<8x256xf32>,
    return
  }
  func.func @transform_0(%arg0: i32) -> i32 {
    %c0_i32 = arith.constant 0 : i32
    %c0_i32_0 = arith.constant 0 : i32
    return %c0_i32 : i32
  }
  func.func @transform_1(%arg0: i32) -> (i32, i32) {
    %c0_i32 = arith.constant 0 : i32
    %c0_i32_0 = arith.constant 0 : i32
    return %c0_i32, %arg0 : i32, i32
  }
  func.func @transform_2(%arg0: i32) -> (i32, i32) {
    %c0_i32 = arith.constant 0 : i32
    %c0_i32_0 = arith.constant 0 : i32
    return %c0_i32, %arg0 : i32, i32
  }
}

</mosaic_0001>

<llo_original>
// kernel: tpu_custom_call.1
$region0: #{tpu_custom_call.1}
  #allocation0 [shape = 'u32[]', space=smem, size = 0x4, offset = 0x4, fixed_abs, tag = 'smem constant byte address 0x4 - core index']
  #allocation1 [shape = 'u32[144,128]{1,0:T(1,128)}', space=vmem, size = 0x12000, scoped, tag = 'internal scratch']
  %s0 = inlined_call_operand.hbm [shape: f32[169], index: 0, kind: input, shape index: {}]
  %s1 = inlined_call_operand.hbm [shape: f32[8,1024], index: 1, kind: input, shape index: {}]
  %s2 = inlined_call_operand.hbm [shape: f32[8,1024], index: 2, kind: output, shape index: {}]
  %s3 = sld [smem:[#allocation0]]
  $region49: #{tpu_custom_call.1} parent=0
    _
  %s5 = ssub.s32 1, %s3
  %s6 = scalar_select 0, %s5, %s3
  $region1: #{tpu_custom_call.1} parent=0
    #allocation2 [shape = 'u8[1024]{0}', space=smem, size = 0x400, scoped, tag = 'input window, operand 0, single buffered']
    #allocation3 [shape = 's32[2]{0}', space=sflag, size = 0x8, scoped, tag = 'scoped memory for tpu_custom_call.1']
    #allocation4 [shape = 's32[2]{0}', space=sflag, size = 0x8, scoped, tag = 'scoped memory for tpu_custom_call.1']
    #allocation5 [shape = 's32[2]{0}', space=sflag, size = 0x8, scoped, tag = 'scoped memory for tpu_custom_call.1']
    #allocation6 [shape = 'u8[16384]{0}', space=vmem, size = 0x4000, scoped, tag = 'input window, operand 1']
    #allocation7 [shape = 'u8[16384]{0}', space=vmem, size = 0x4000, scoped, tag = 'output window, operand 0']
    %7 = vsyncpa [#allocation5], 0
    %8 = vsyncpa [#allocation3], 0
    %s9 = scalar_lea.sflag [#allocation3], 1
    %10 = vsyncpa %s9, 0
    %11 = vsyncpa [#allocation4], 0
    %s12 = scalar_lea.sflag [#allocation4], 1
    %13 = vsyncpa %s12, 0
    loop: start=0, step=1, limit=6
    $region2: #{tpu_custom_call.1} parent=1 // loop_pre_header
      _
    $region3: #{tpu_custom_call.1} parent=1 // loop_header
      %s15 = sphi 0, %s19
      %p16 = scmp.ge.s32.totalorder %s15, 6
      %s23 = sphi 0, %s23
      %s25 = sphi 0, %s23
      %s26 = sphi 0, %s25
      %s40 = sphi 0, %s26
      %s46 = sphi 0, %s48
      %s49 = sphi 0, %s46
      %s50 = sphi 0, %s49
      %s66 = sphi 0, %s50
      %s72 = sphi 0, %s74
      %s75 = sphi 0, %s72
      %s76 = sphi 0, %s75
      %s92 = sphi 0, %s76
    $region4: #{tpu_custom_call.1} parent=1 // loop_header_branch
      %18 = sbr.rel (%p16) target = $region8
    $region5: #{tpu_custom_call.1} parent=1 // loop_body
      %s20 = ssub.s32 %s15, 1
      %s21 = ssub.s32 %s15, 2
      %s22 = sadd.s32 %s15, 1
      %s24 = sadd.s32 %s23, 1
      %p27 = scmp.eq.s32.totalorder %s15, 3
      %p28 = scmp.ne.s32.totalorder %s23, %s25
      %p29 = scmp.eq.s32.totalorder %s15, 0
      %p30 = por %p28, %p29
      %p31 = scmp.ne.s32.totalorder %s23, %s25
      %p32 = scmp.eq.s32.totalorder %s20, 3
      %p33 = por %p31, %p32
      %p34 = scmp.ne.s32.totalorder %s25, %s26
      %p35 = scmp.eq.s32.totalorder %s20, 0
      %p36 = por %p34, %p35
      %p37 = scmp.ne.s32.totalorder %s25, %s26
      %p38 = scmp.eq.s32.totalorder %s21, 3
      %p39 = por %p37, %p38
      %p41 = scmp.ne.s32.totalorder %s26, %s40
      %p42 = scmp.eq.s32.totalorder %s21, 0
      %p43 = por %p41, %p42
      %s44 = ssub.s32 %s15, %s22
      %p45 = scmp.eq.s32.totalorder %s44, 0
      %s47 = sadd.s32 %s46, 1
      %s48 = scalar_select %p45, %s46, %s47
      %p51 = pneg %p45
      %p52 = scmp.eq.s32.totalorder %s15, 3
      %p53 = por %p51, %p52
      %p54 = scmp.ne.s32.totalorder %s46, %s49
      %p55 = scmp.eq.s32.totalorder %s15, 0
      %p56 = por %p54, %p55
      %p57 = scmp.ne.s32.totalorder %s46, %s49
      %p58 = scmp.eq.s32.totalorder %s20, 3
      %p59 = por %p57, %p58
      %p60 = scmp.ne.s32.totalorder %s49, %s50
      %p61 = scmp.eq.s32.totalorder %s20, 0
      %p62 = por %p60, %p61
      %p63 = scmp.ne.s32.totalorder %s49, %s50
      %p64 = scmp.eq.s32.totalorder %s21, 3
      %p65 = por %p63, %p64
      %p67 = scmp.ne.s32.totalorder %s50, %s66
      %p68 = scmp.eq.s32.totalorder %s21, 0
      %p69 = por %p67, %p68
      %s70 = ssub.s32 %s15, %s22
      %p71 = scmp.eq.s32.totalorder %s70, 0
      %s73 = sadd.s32 %s72, 1
      %s74 = scalar_select %p71, %s72, %s73
      %p77 = pneg %p71
      %p78 = scmp.eq.s32.totalorder %s15, 3
      %p79 = por %p77, %p78
      %p80 = scmp.ne.s32.totalorder %s72, %s75
      %p81 = scmp.eq.s32.totalorder %s15, 0
      %p82 = por %p80, %p81
      %p83 = scmp.ne.s32.totalorder %s72, %s75
      %p84 = scmp.eq.s32.totalorder %s20, 3
      %p85 = por %p83, %p84
      %p86 = scmp.ne.s32.totalorder %s75, %s76
      %p87 = scmp.eq.s32.totalorder %s20, 0
      %p88 = por %p86, %p87
      %p89 = scmp.ne.s32.totalorder %s75, %s76
      %p90 = scmp.eq.s32.totalorder %s21, 3
      %p91 = por %p89, %p90
      %p93 = scmp.ne.s32.totalorder %s76, %s92
      %p94 = scmp.eq.s32.totalorder %s21, 0
      %p95 = por %p93, %p94
      %p96 = scmp.le.s32.totalorder 1, %s15
      %p97 = scmp.lt.s32.totalorder %s15, 5
      %p98 = pnand %p96, %p97
      %p99 = pneg %p98
      // Predicated region
      $region9: #{tpu_custom_call.1} parent=5 // pred_check
        _
      $region10: #{tpu_custom_call.1} parent=5 // pred_check_branch
        %101 = sbr.rel (%p98) target = $region12
      $region11: #{tpu_custom_call.1} parent=5 // pred_region
        %s102 = ssub.s32 %s15, 1
        // Predicated region
        $region13: #{tpu_custom_call.1} parent=11 // pred_check
          %p103 = pneg %p36
        $region14: #{tpu_custom_call.1} parent=11 // pred_check_branch
          %105 = sbr.rel (%p103) target = $region16
        $region15: #{tpu_custom_call.1} parent=11 // pred_region
          %s107 = ssub.s32 32, 32
          %108 = vsyncadd [#allocation5], %s107
          %111 = dma.hbm_to_smem %s0, 32, [#allocation2], [#allocation5]
        $region16: #{tpu_custom_call.1} parent=11 // pred_fallthru
          _
      $region12: #{tpu_custom_call.1} parent=5 // pred_fallthru
        _
      %p112 = scmp.lt.s32.totalorder %s15, 4
      // Predicated region
      $region17: #{tpu_custom_call.1} parent=5 // pred_check
        %p113 = pneg %p112
      $region18: #{tpu_custom_call.1} parent=5 // pred_check_branch
        %115 = sbr.rel (%p113) target = $region20
      $region19: #{tpu_custom_call.1} parent=5 // pred_region
        // Predicated region
        $region21: #{tpu_custom_call.1} parent=19 // pred_check
          %p116 = pneg %p56
        $region22: #{tpu_custom_call.1} parent=19 // pred_check_branch
          %118 = sbr.rel (%p116) target = $region24
        $region23: #{tpu_custom_call.1} parent=19 // pred_region
          %s119 = sand.u32 %s46, 1
          %s120 = scalar_lea.sflag [#allocation3], %s119
          %s121 = sand.u32 %s46, 1
          %s122 = smul.addr %s121, 16
          %s123 = scalar_lea.vmem [#allocation6], %s122
          %s124 = smul.u32 2, %s15
          %s126 = ssub.s32 256, 256
          %127 = vsyncadd %s120, %s126
          %s128 = smul.addr %s124, 128
          %s129 = scalar_lea.hbm %s1, %s128
          %s131 = sshll.u32 %s123, 4
          %s132 = int_to_ptr.vmem [resolvable:$true] %s131
          %134 = dma.hbm_to_vmem [thread:$0]  %s129, 256, %s132, %s120
        $region24: #{tpu_custom_call.1} parent=19 // pred_fallthru
          _
      $region20: #{tpu_custom_call.1} parent=5 // pred_fallthru
        _
      %p135 = scmp.le.s32.totalorder 1, %s15
      %p136 = scmp.lt.s32.totalorder %s15, 5
      %p137 = pnand %p135, %p136
      %p138 = pneg %p137
      // Predicated region
      $region25: #{tpu_custom_call.1} parent=5 // pred_check
        _
      $region26: #{tpu_custom_call.1} parent=5 // pred_check_branch
        %140 = sbr.rel (%p137) target = $region28
      $region27: #{tpu_custom_call.1} parent=5 // pred_region
        %s141 = ssub.s32 %s15, 1
        // Predicated region
        $region29: #{tpu_custom_call.1} parent=27 // pred_check
          %p142 = pneg %p36
        $region30: #{tpu_custom_call.1} parent=27 // pred_check_branch
          %144 = sbr.rel (%p142) target = $region32
        $region31: #{tpu_custom_call.1} parent=27 // pred_region
          %145 = dma.done [#allocation5], 32
        $region32: #{tpu_custom_call.1} parent=27 // pred_fallthru
          _
        %s146 = sand.u32 %s49, 1
        %s147 = scalar_lea.sflag [#allocation3], %s146
        %s148 = sand.u32 %s49, 1
        %s149 = smul.addr %s148, 16
        %s150 = scalar_lea.vmem [#allocation6], %s149
        // Predicated region
        $region33: #{tpu_custom_call.1} parent=27 // pred_check
          %p151 = pneg %p62
        $region34: #{tpu_custom_call.1} parent=27 // pred_check_branch
          %153 = sbr.rel (%p151) target = $region36
        $region35: #{tpu_custom_call.1} parent=27 // pred_region
          %154 = dma.done %s147, 256
        $region36: #{tpu_custom_call.1} parent=27 // pred_fallthru
          _
        %155 = sfence
        %p156 = pneg %p36
        %p157 = pneg %p33
        %s158 = sand.u32 %s49, 1
        %s159 = scalar_lea.sflag [#allocation3], %s158
        %s160 = sand.u32 %s49, 1
        %s161 = smul.addr %s160, 16
        %s162 = scalar_lea.vmem [#allocation6], %s161
        %p163 = pneg %p62
        %p164 = pneg %p59
        %p165 = pneg %p88
        %p166 = pneg %p85
        %s167 = sand.u32 %s75, 1
        %s168 = scalar_lea.sflag [#allocation4], %s167
        %s169 = sand.u32 %s75, 1
        %s170 = smul.addr %s169, 16
        %s171 = scalar_lea.vmem [#allocation7], %s170
        %s172 = smul.u32 2, %s20
        %s173 = smul.u32 2, %s20
        %v174 = vld [vmem:[%s150] sm:$0xff]
        %v175 = vld [vmem:[%s150 + $0x8] sm:$0xff]
        %s176 = sld [smem:[#allocation2]]
        %s177 = sld [smem:[#allocation2 + $0x8]]
        %v178 = vstv %s176
        %v179 = vmul.f32 %v178, %v174
        %v180 = vmul.f32 %v178, %v175
        %v181 = vstv %s177
        %v182 = vadd.f32 %v179, %v181
        %v183 = vadd.f32 %v180, %v181
        %v184 = vmul.f32 %v182, 0.5
        %v185 = vmul.f32 %v183, 0.5
        %v186 = vtanh.pop %v184
        %v187 = vtanh.pop %v185
        %v188 = vmul.f32 %v186, 0.5
        %v189 = vmul.f32 %v187, 0.5
        %v190 = vadd.f32 %v188, 0.5
        %v191 = vadd.f32 %v189, 0.5
        %s192 = sld [smem:[#allocation2 + $0x1]]
        %s193 = sld [smem:[#allocation2 + $0x9]]
        %v194 = vstv %s192
        %v195 = vmul.f32 %v194, %v174
        %v196 = vmul.f32 %v194, %v175
        %v197 = vstv %s193
        %v198 = vadd.f32 %v195, %v197
        %v199 = vadd.f32 %v196, %v197
        %v200 = vmul.f32 %v198, 0.5
        %v201 = vmul.f32 %v199, 0.5
        %v202 = vtanh.pop %v200
        %v203 = vtanh.pop %v201
        %v204 = vmul.f32 %v202, 0.5
        %v205 = vmul.f32 %v203, 0.5
        %v206 = vadd.f32 %v204, 0.5
        %v207 = vadd.f32 %v205, 0.5
        %s208 = sld [smem:[#allocation2 + $0x2]]
        %s209 = sld [smem:[#allocation2 + $0xa]]
        %v210 = vstv %s208
        %v211 = vmul.f32 %v210, %v174
        %v212 = vmul.f32 %v210, %v175
        %v213 = vstv %s209
        %v214 = vadd.f32 %v211, %v213
        %v215 = vadd.f32 %v212, %v213
        %v216 = vmul.f32 %v214, 0.5
        %v217 = vmul.f32 %v215, 0.5
        %v218 = vtanh.pop %v216
        %v219 = vtanh.pop %v217
        %v220 = vmul.f32 %v218, 0.5
        %v221 = vmul.f32 %v219, 0.5
        %v222 = vadd.f32 %v220, 0.5
        %v223 = vadd.f32 %v221, 0.5
        %s224 = sld [smem:[#allocation2 + $0x3]]
        %s225 = sld [smem:[#allocation2 + $0xb]]
        %v226 = vstv %s224
        %v227 = vmul.f32 %v226, %v174
        %v228 = vmul.f32 %v226, %v175
        %v229 = vstv %s225
        %v230 = vadd.f32 %v227, %v229
        %v231 = vadd.f32 %v228, %v229
        %v232 = vmul.f32 %v230, 0.5
        %v233 = vmul.f32 %v231, 0.5
        %v234 = vtanh.pop %v232
        %v235 = vtanh.pop %v233
        %v236 = vmul.f32 %v234, 0.5
        %v237 = vmul.f32 %v235, 0.5
        %v238 = vadd.f32 %v236, 0.5
        %v239 = vadd.f32 %v237, 0.5
        %s240 = sld [smem:[#allocation2 + $0x4]]
        %s241 = sld [smem:[#allocation2 + $0xc]]
        %v242 = vstv %s240
        %v243 = vmul.f32 %v242, %v174
        %v244 = vmul.f32 %v242, %v175
        %v245 = vstv %s241
        %v246 = vadd.f32 %v243, %v245
        %v247 = vadd.f32 %v244, %v245
        %v248 = vmul.f32 %v246, 0.5
        %v249 = vmul.f32 %v247, 0.5
        %v250 = vtanh.pop %v248
        %v251 = vtanh.pop %v249
        %v252 = vmul.f32 %v250, 0.5
        %v253 = vmul.f32 %v251, 0.5
        %v254 = vadd.f32 %v252, 0.5
        %v255 = vadd.f32 %v253, 0.5
        %s256 = sld [smem:[#allocation2 + $0x5]]
        %s257 = sld [smem:[#allocation2 + $0xd]]
        %v258 = vstv %s256
        %v259 = vmul.f32 %v258, %v174
        %v260 = vmul.f32 %v258, %v175
        %v261 = vstv %s257
        %v262 = vadd.f32 %v259, %v261
        %v263 = vadd.f32 %v260, %v261
        %v264 = vmul.f32 %v262, 0.5
        %v265 = vmul.f32 %v263, 0.5
        %v266 = vtanh.pop %v264
        %v267 = vtanh.pop %v265
        %v268 = vmul.f32 %v266, 0.5
        %v269 = vmul.f32 %v267, 0.5
        %v270 = vadd.f32 %v268, 0.5
        %v271 = vadd.f32 %v269, 0.5
        %s272 = sld [smem:[#allocation2 + $0x6]]
        %s273 = sld [smem:[#allocation2 + $0xe]]
        %v274 = vstv %s272
        %v275 = vmul.f32 %v274, %v174
        %v276 = vmul.f32 %v274, %v175
        %v277 = vstv %s273
        %v278 = vadd.f32 %v275, %v277
        %v279 = vadd.f32 %v276, %v277
        %v280 = vmul.f32 %v278, 0.5
        %v281 = vmul.f32 %v279, 0.5
        %v282 = vtanh.pop %v280
        %v283 = vtanh.pop %v281
        %v284 = vmul.f32 %v282, 0.5
        %v285 = vmul.f32 %v283, 0.5
        %v286 = vadd.f32 %v284, 0.5
        %v287 = vadd.f32 %v285, 0.5
        %s288 = sld [smem:[#allocation2 + $0x7]]
        %s289 = sld [smem:[#allocation2 + $0xf]]
        %v290 = vstv %s288
        %v291 = vmul.f32 %v290, %v174
        %v292 = vmul.f32 %v290, %v175
        %v293 = vstv %s289
        %v294 = vadd.f32 %v291, %v293
        %v295 = vadd.f32 %v292, %v293
        %v296 = vmul.f32 %v294, 0.5
        %v297 = vmul.f32 %v295, 0.5
        %v298 = vtanh.pop %v296
        %v299 = vtanh.pop %v297
        %v300 = vmul.f32 %v298, 0.5
        %v301 = vmul.f32 %v299, 0.5
        %v302 = vadd.f32 %v300, 0.5
        %v303 = vadd.f32 %v301, 0.5
        %s304 = sld [smem:[#allocation2 + $0x10]]
        %v305 = vstv %s304
        %v306 = vmul.f32 %v305, %v190
        %v307 = vmul.f32 %v305, %v191
        %s308 = sld [smem:[#allocation2 + $0x50]]
        %v309 = vstv %s308
        %v310 = vadd.f32 %v306, %v309
        %v311 = vadd.f32 %v307, %v309
        %s312 = sld [smem:[#allocation2 + $0x11]]
        %v313 = vstv %s312
        %v314 = vmul.f32 %v313, %v206
        %v315 = vmul.f32 %v313, %v207
        %v316 = vadd.f32 %v310, %v314
        %v317 = vadd.f32 %v311, %v315
        %s318 = sld [smem:[#allocation2 + $0x12]]
        %v319 = vstv %s318
        %v320 = vmul.f32 %v319, %v222
        %v321 = vmul.f32 %v319, %v223
        %v322 = vadd.f32 %v316, %v320
        %v323 = vadd.f32 %v317, %v321
        %s324 = sld [smem:[#allocation2 + $0x13]]
        %v325 = vstv %s324
        %v326 = vmul.f32 %v325, %v238
        %v327 = vmul.f32 %v325, %v239
        %v328 = vadd.f32 %v322, %v326
        %v329 = vadd.f32 %v323, %v327
        %s330 = sld [smem:[#allocation2 + $0x14]]
        %v331 = vstv %s330
        %v332 = vmul.f32 %v331, %v254
        %v333 = vmul.f32 %v331, %v255
        %v334 = vadd.f32 %v328, %v332
        %v335 = vadd.f32 %v329, %v333
        %s336 = sld [smem:[#allocation2 + $0x15]]
        %v337 = vstv %s336
        %v338 = vmul.f32 %v337, %v270
        %v339 = vmul.f32 %v337, %v271
        %v340 = vadd.f32 %v334, %v338
        %v341 = vadd.f32 %v335, %v339
        %s342 = sld [smem:[#allocation2 + $0x16]]
        %v343 = vstv %s342
        %v344 = vmul.f32 %v343, %v286
        %v345 = vmul.f32 %v343, %v287
        %v346 = vadd.f32 %v340, %v344
        %v347 = vadd.f32 %v341, %v345
        %s348 = sld [smem:[#allocation2 + $0x17]]
        %v349 = vstv %s348
        %v350 = vmul.f32 %v349, %v302
        %v351 = vmul.f32 %v349, %v303
        %v352 = vadd.f32 %v346, %v350
        %v353 = vadd.f32 %v347, %v351
        %v354 = vmul.f32 %v352, 0.5
        %v355 = vmul.f32 %v353, 0.5
        %v356 = vtanh.pop %v354
        %v357 = vtanh.pop %v355
        %v358 = vmul.f32 %v356, 0.5
        %v359 = vmul.f32 %v357, 0.5
        %v360 = vadd.f32 %v358, 0.5
        %v361 = vadd.f32 %v359, 0.5
        %s362 = sld [smem:[#allocation2 + $0x18]]
        %v363 = vstv %s362
        %v364 = vmul.f32 %v363, %v190
        %v365 = vmul.f32 %v363, %v191
        %s366 = sld [smem:[#allocation2 + $0x51]]
        %v367 = vstv %s366
        %v368 = vadd.f32 %v364, %v367
        %v369 = vadd.f32 %v365, %v367
        %s370 = sld [smem:[#allocation2 + $0x19]]
        %v371 = vstv %s370
        %v372 = vmul.f32 %v371, %v206
        %v373 = vmul.f32 %v371, %v207
        %v374 = vadd.f32 %v368, %v372
        %v375 = vadd.f32 %v369, %v373
        %s376 = sld [smem:[#allocation2 + $0x1a]]
        %v377 = vstv %s376
        %v378 = vmul.f32 %v377, %v222
        %v379 = vmul.f32 %v377, %v223
        %v380 = vadd.f32 %v374, %v378
        %v381 = vadd.f32 %v375, %v379
        %s382 = sld [smem:[#allocation2 + $0x1b]]
        %v383 = vstv %s382
        %v384 = vmul.f32 %v383, %v238
        %v385 = vmul.f32 %v383, %v239
        %v386 = vadd.f32 %v380, %v384
        %v387 = vadd.f32 %v381, %v385
        %s388 = sld [smem:[#allocation2 + $0x1c]]
        %v389 = vstv %s388
        %v390 = vmul.f32 %v389, %v254
        %v391 = vmul.f32 %v389, %v255
        %v392 = vadd.f32 %v386, %v390
        %v393 = vadd.f32 %v387, %v391
        %s394 = sld [smem:[#allocation2 + $0x1d]]
        %v395 = vstv %s394
        %v396 = vmul.f32 %v395, %v270
        %v397 = vmul.f32 %v395, %v271
        %v398 = vadd.f32 %v392, %v396
        %v399 = vadd.f32 %v393, %v397
        %s400 = sld [smem:[#allocation2 + $0x1e]]
        %v401 = vstv %s400
        %v402 = vmul.f32 %v401, %v286
        %v403 = vmul.f32 %v401, %v287
        %v404 = vadd.f32 %v398, %v402
        %v405 = vadd.f32 %v399, %v403
        %s406 = sld [smem:[#allocation2 + $0x1f]]
        %v407 = vstv %s406
        %v408 = vmul.f32 %v407, %v302
        %v409 = vmul.f32 %v407, %v303
        %v410 = vadd.f32 %v404, %v408
        %v411 = vadd.f32 %v405, %v409
        %v412 = vmul.f32 %v410, 0.5
        %v413 = vmul.f32 %v411, 0.5
        %v414 = vtanh.pop %v412
        %v415 = vtanh.pop %v413
        %v416 = vmul.f32 %v414, 0.5
        %v417 = vmul.f32 %v415, 0.5
        %v418 = vadd.f32 %v416, 0.5
        %v419 = vadd.f32 %v417, 0.5
        %s420 = sld [smem:[#allocation2 + $0x20]]
        %v421 = vstv %s420
        %v422 = vmul.f32 %v421, %v190
        %v423 = vmul.f32 %v421, %v191
        %s424 = sld [smem:[#allocation2 + $0x52]]
        %v425 = vstv %s424
        %v426 = vadd.f32 %v422, %v425
        %v427 = vadd.f32 %v423, %v425
        %s428 = sld [smem:[#allocation2 + $0x21]]
        %v429 = vstv %s428
        %v430 = vmul.f32 %v429, %v206
        %v431 = vmul.f32 %v429, %v207
        %v432 = vadd.f32 %v426, %v430
        %v433 = vadd.f32 %v427, %v431
        %s434 = sld [smem:[#allocation2 + $0x22]]
        %v435 = vstv %s434
        %v436 = vmul.f32 %v435, %v222
        %v437 = vmul.f32 %v435, %v223
        %v438 = vadd.f32 %v432, %v436
        %v439 = vadd.f32 %v433, %v437
        %s440 = sld [smem:[#allocation2 + $0x23]]
        %v441 = vstv %s440
        %v442 = vmul.f32 %v441, %v238
        %v443 = vmul.f32 %v441, %v239
        %v444 = vadd.f32 %v438, %v442
        %v445 = vadd.f32 %v439, %v443
        %s446 = sld [smem:[#allocation2 + $0x24]]
        %v447 = vstv %s446
        %v448 = vmul.f32 %v447, %v254
        %v449 = vmul.f32 %v447, %v255
        %v450 = vadd.f32 %v444, %v448
        %v451 = vadd.f32 %v445, %v449
        %s452 = sld [smem:[#allocation2 + $0x25]]
        %v453 = vstv %s452
        %v454 = vmul.f32 %v453, %v270
        %v455 = vmul.f32 %v453, %v271
        %v456 = vadd.f32 %v450, %v454
        %v457 = vadd.f32 %v451, %v455
        %s458 = sld [smem:[#allocation2 + $0x26]]
        %v459 = vstv %s458
        %v460 = vmul.f32 %v459, %v286
        %v461 = vmul.f32 %v459, %v287
        %v462 = vadd.f32 %v456, %v460
        %v463 = vadd.f32 %v457, %v461
        %s464 = sld [smem:[#allocation2 + $0x27]]
        %v465 = vstv %s464
        %v466 = vmul.f32 %v465, %v302
        %v467 = vmul.f32 %v465, %v303
        %v468 = vadd.f32 %v462, %v466
        %v469 = vadd.f32 %v463, %v467
        %v470 = vmul.f32 %v468, 0.5
        %v471 = vmul.f32 %v469, 0.5
        %v472 = vtanh.pop %v470
        %v473 = vtanh.pop %v471
        %v474 = vmul.f32 %v472, 0.5
        %v475 = vmul.f32 %v473, 0.5
        %v476 = vadd.f32 %v474, 0.5
        %v477 = vadd.f32 %v475, 0.5
        %s478 = sld [smem:[#allocation2 + $0x28]]
        %v479 = vstv %s478
        %v480 = vmul.f32 %v479, %v190
        %v481 = vmul.f32 %v479, %v191
        %s482 = sld [smem:[#allocation2 + $0x53]]
        %v483 = vstv %s482
        %v484 = vadd.f32 %v480, %v483
        %v485 = vadd.f32 %v481, %v483
        %s486 = sld [smem:[#allocation2 + $0x29]]
        %v487 = vstv %s486
        %v488 = vmul.f32 %v487, %v206
        %v489 = vmul.f32 %v487, %v207
        %v490 = vadd.f32 %v484, %v488
        %v491 = vadd.f32 %v485, %v489
        %s492 = sld [smem:[#allocation2 + $0x2a]]
        %v493 = vstv %s492
        %v494 = vmul.f32 %v493, %v222
        %v495 = vmul.f32 %v493, %v223
        %v496 = vadd.f32 %v490, %v494
        %v497 = vadd.f32 %v491, %v495
        %s498 = sld [smem:[#allocation2 + $0x2b]]
        %v499 = vstv %s498
        %v500 = vmul.f32 %v499, %v238
        %v501 = vmul.f32 %v499, %v239
        %v502 = vadd.f32 %v496, %v500
        %v503 = vadd.f32 %v497, %v501
        %s504 = sld [smem:[#allocation2 + $0x2c]]
        %v505 = vstv %s504
        %v506 = vmul.f32 %v505, %v254
        %v507 = vmul.f32 %v505, %v255
        %v508 = vadd.f32 %v502, %v506
        %v509 = vadd.f32 %v503, %v507
        %s510 = sld [smem:[#allocation2 + $0x2d]]
        %v511 = vstv %s510
        %v512 = vmul.f32 %v511, %v270
        %v513 = vmul.f32 %v511, %v271
        %v514 = vadd.f32 %v508, %v512
        %v515 = vadd.f32 %v509, %v513
        %s516 = sld [smem:[#allocation2 + $0x2e]]
        %v517 = vstv %s516
        %v518 = vmul.f32 %v517, %v286
        %v519 = vmul.f32 %v517, %v287
        %v520 = vadd.f32 %v514, %v518
        %v521 = vadd.f32 %v515, %v519
        %s522 = sld [smem:[#allocation2 + $0x2f]]
        %v523 = vstv %s522
        %v524 = vmul.f32 %v523, %v302
        %v525 = vmul.f32 %v523, %v303
        %v526 = vadd.f32 %v520, %v524
        %v527 = vadd.f32 %v521, %v525
        %v528 = vmul.f32 %v526, 0.5
        %v529 = vmul.f32 %v527, 0.5
        %v530 = vtanh.pop %v528
        %v531 = vtanh.pop %v529
        %v532 = vmul.f32 %v530, 0.5
        %v533 = vmul.f32 %v531, 0.5
        %v534 = vadd.f32 %v532, 0.5
        %v535 = vadd.f32 %v533, 0.5
        %s536 = sld [smem:[#allocation2 + $0x30]]
        %v537 = vstv %s536
        %v538 = vmul.f32 %v537, %v190
        %v539 = vmul.f32 %v537, %v191
        %s540 = sld [smem:[#allocation2 + $0x54]]
        %v541 = vstv %s540
        %v542 = vadd.f32 %v538, %v541
        %v543 = vadd.f32 %v539, %v541
        %s544 = sld [smem:[#allocation2 + $0x31]]
        %v545 = vstv %s544
        %v546 = vmul.f32 %v545, %v206
        %v547 = vmul.f32 %v545, %v207
        %v548 = vadd.f32 %v542, %v546
        %v549 = vadd.f32 %v543, %v547
        %s550 = sld [smem:[#allocation2 + $0x32]]
        %v551 = vstv %s550
        %v552 = vmul.f32 %v551, %v222
        %v553 = vmul.f32 %v551, %v223
        %v554 = vadd.f32 %v548, %v552
        %v555 = vadd.f32 %v549, %v553
        %s556 = sld [smem:[#allocation2 + $0x33]]
        %v557 = vstv %s556
        %v558 = vmul.f32 %v557, %v238
        %v559 = vmul.f32 %v557, %v239
        %v560 = vadd.f32 %v554, %v558
        %v561 = vadd.f32 %v555, %v559
        %s562 = sld [smem:[#allocation2 + $0x34]]
        %v563 = vstv %s562
        %v564 = vmul.f32 %v563, %v254
        %v565 = vmul.f32 %v563, %v255
        %v566 = vadd.f32 %v560, %v564
        %v567 = vadd.f32 %v561, %v565
        %s568 = sld [smem:[#allocation2 + $0x35]]
        %v569 = vstv %s568
        %v570 = vmul.f32 %v569, %v270
        %v571 = vmul.f32 %v569, %v271
        %v572 = vadd.f32 %v566, %v570
        %v573 = vadd.f32 %v567, %v571
        %s574 = sld [smem:[#allocation2 + $0x36]]
        %v575 = vstv %s574
        %v576 = vmul.f32 %v575, %v286
        %v577 = vmul.f32 %v575, %v287
        %v578 = vadd.f32 %v572, %v576
        %v579 = vadd.f32 %v573, %v577
        %s580 = sld [smem:[#allocation2 + $0x37]]
        %v581 = vstv %s580
        %v582 = vmul.f32 %v581, %v302
        %v583 = vmul.f32 %v581, %v303
        %v584 = vadd.f32 %v578, %v582
        %v585 = vadd.f32 %v579, %v583
        %v586 = vmul.f32 %v584, 0.5
        %v587 = vmul.f32 %v585, 0.5
        %v588 = vtanh.pop %v586
        %v589 = vtanh.pop %v587
        %v590 = vmul.f32 %v588, 0.5
        %v591 = vmul.f32 %v589, 0.5
        %v592 = vadd.f32 %v590, 0.5
        %v593 = vadd.f32 %v591, 0.5
        %s594 = sld [smem:[#allocation2 + $0x38]]
        %v595 = vstv %s594
        %v596 = vmul.f32 %v595, %v190
        %v597 = vmul.f32 %v595, %v191
        %s598 = sld [smem:[#allocation2 + $0x55]]
        %v599 = vstv %s598
        %v600 = vadd.f32 %v596, %v599
        %v601 = vadd.f32 %v597, %v599
        %s602 = sld [smem:[#allocation2 + $0x39]]
        %v603 = vstv %s602
        %v604 = vmul.f32 %v603, %v206
        %v605 = vmul.f32 %v603, %v207
        %v606 = vadd.f32 %v600, %v604
        %v607 = vadd.f32 %v601, %v605
        %s608 = sld [smem:[#allocation2 + $0x3a]]
        %v609 = vstv %s608
        %v610 = vmul.f32 %v609, %v222
        %v611 = vmul.f32 %v609, %v223
        %v612 = vadd.f32 %v606, %v610
        %v613 = vadd.f32 %v607, %v611
        %s614 = sld [smem:[#allocation2 + $0x3b]]
        %v615 = vstv %s614
        %v616 = vmul.f32 %v615, %v238
        %v617 = vmul.f32 %v615, %v239
        %v618 = vadd.f32 %v612, %v616
        %v619 = vadd.f32 %v613, %v617
        %s620 = sld [smem:[#allocation2 + $0x3c]]
        %v621 = vstv %s620
        %v622 = vmul.f32 %v621, %v254
        %v623 = vmul.f32 %v621, %v255
        %v624 = vadd.f32 %v618, %v622
        %v625 = vadd.f32 %v619, %v623
        %s626 = sld [smem:[#allocation2 + $0x3d]]
        %v627 = vstv %s626
        %v628 = vmul.f32 %v627, %v270
        %v629 = vmul.f32 %v627, %v271
        %v630 = vadd.f32 %v624, %v628
        %v631 = vadd.f32 %v625, %v629
        %s632 = sld [smem:[#allocation2 + $0x3e]]
        %v633 = vstv %s632
        %v634 = vmul.f32 %v633, %v286
        %v635 = vmul.f32 %v633, %v287
        %v636 = vadd.f32 %v630, %v634
        %v637 = vadd.f32 %v631, %v635
        %s638 = sld [smem:[#allocation2 + $0x3f]]
        %v639 = vstv %s638
        %v640 = vmul.f32 %v639, %v302
        %v641 = vmul.f32 %v639, %v303
        %v642 = vadd.f32 %v636, %v640
        %v643 = vadd.f32 %v637, %v641
        %v644 = vmul.f32 %v642, 0.5
        %v645 = vmul.f32 %v643, 0.5
        %v646 = vtanh.pop %v644
        %v647 = vtanh.pop %v645
        %v648 = vmul.f32 %v646, 0.5
        %v649 = vmul.f32 %v647, 0.5
        %v650 = vadd.f32 %v648, 0.5
        %v651 = vadd.f32 %v649, 0.5
        %s652 = sld [smem:[#allocation2 + $0x40]]
        %v653 = vstv %s652
        %v654 = vmul.f32 %v653, %v190
        %v655 = vmul.f32 %v653, %v191
        %s656 = sld [smem:[#allocation2 + $0x56]]
        %v657 = vstv %s656
        %v658 = vadd.f32 %v654, %v657
        %v659 = vadd.f32 %v655, %v657
        %s660 = sld [smem:[#allocation2 + $0x41]]
        %v661 = vstv %s660
        %v662 = vmul.f32 %v661, %v206
        %v663 = vmul.f32 %v661, %v207
        %v664 = vadd.f32 %v658, %v662
        %v665 = vadd.f32 %v659, %v663
        %s666 = sld [smem:[#allocation2 + $0x42]]
        %v667 = vstv %s666
        %v668 = vmul.f32 %v667, %v222
        %v669 = vmul.f32 %v667, %v223
        %v670 = vadd.f32 %v664, %v668
        %v671 = vadd.f32 %v665, %v669
        %s672 = sld [smem:[#allocation2 + $0x43]]
        %v673 = vstv %s672
        %v674 = vmul.f32 %v673, %v238
        %v675 = vmul.f32 %v673, %v239
        %v676 = vadd.f32 %v670, %v674
        %v677 = vadd.f32 %v671, %v675
        %s678 = sld [smem:[#allocation2 + $0x44]]
        %v679 = vstv %s678
        %v680 = vmul.f32 %v679, %v254
        %v681 = vmul.f32 %v679, %v255
        %v682 = vadd.f32 %v676, %v680
        %v683 = vadd.f32 %v677, %v681
        %s684 = sld [smem:[#allocation2 + $0x45]]
        %v685 = vstv %s684
        %v686 = vmul.f32 %v685, %v270
        %v687 = vmul.f32 %v685, %v271
        %v688 = vadd.f32 %v682, %v686
        %v689 = vadd.f32 %v683, %v687
        %s690 = sld [smem:[#allocation2 + $0x46]]
        %v691 = vstv %s690
        %v692 = vmul.f32 %v691, %v286
        %v693 = vmul.f32 %v691, %v287
        %v694 = vadd.f32 %v688, %v692
        %v695 = vadd.f32 %v689, %v693
        %s696 = sld [smem:[#allocation2 + $0x47]]
        %v697 = vstv %s696
        %v698 = vmul.f32 %v697, %v302
        %v699 = vmul.f32 %v697, %v303
        %v700 = vadd.f32 %v694, %v698
        %v701 = vadd.f32 %v695, %v699
        %v702 = vmul.f32 %v700, 0.5
        %v703 = vmul.f32 %v701, 0.5
        %v704 = vtanh.pop %v702
        %v705 = vtanh.pop %v703
        %v706 = vmul.f32 %v704, 0.5
        %v707 = vmul.f32 %v705, 0.5
        %v708 = vadd.f32 %v706, 0.5
        %v709 = vadd.f32 %v707, 0.5
        %s710 = sld [smem:[#allocation2 + $0x48]]
        %v711 = vstv %s710
        %v712 = vmul.f32 %v711, %v190
        %v713 = vmul.f32 %v711, %v191
        %s714 = sld [smem:[#allocation2 + $0x57]]
        %v715 = vstv %s714
        %v716 = vadd.f32 %v712, %v715
        %v717 = vadd.f32 %v713, %v715
        %s718 = sld [smem:[#allocation2 + $0x49]]
        %v719 = vstv %s718
        %v720 = vmul.f32 %v719, %v206
        %v721 = vmul.f32 %v719, %v207
        %v722 = vadd.f32 %v716, %v720
        %v723 = vadd.f32 %v717, %v721
        %s724 = sld [smem:[#allocation2 + $0x4a]]
        %v725 = vstv %s724
        %v726 = vmul.f32 %v725, %v222
        %v727 = vmul.f32 %v725, %v223
        %v728 = vadd.f32 %v722, %v726
        %v729 = vadd.f32 %v723, %v727
        %s730 = sld [smem:[#allocation2 + $0x4b]]
        %v731 = vstv %s730
        %v732 = vmul.f32 %v731, %v238
        %v733 = vmul.f32 %v731, %v239
        %v734 = vadd.f32 %v728, %v732
        %v735 = vadd.f32 %v729, %v733
        %s736 = sld [smem:[#allocation2 + $0x4c]]
        %v737 = vstv %s736
        %v738 = vmul.f32 %v737, %v254
        %v739 = vmul.f32 %v737, %v255
        %v740 = vadd.f32 %v734, %v738
        %v741 = vadd.f32 %v735, %v739
        %s742 = sld [smem:[#allocation2 + $0x4d]]
        %v743 = vstv %s742
        %v744 = vmul.f32 %v743, %v270
        %v745 = vmul.f32 %v743, %v271
        %v746 = vadd.f32 %v740, %v744
        %v747 = vadd.f32 %v741, %v745
        %s748 = sld [smem:[#allocation2 + $0x4e]]
        %v749 = vstv %s748
        %v750 = vmul.f32 %v749, %v286
        %v751 = vmul.f32 %v749, %v287
        %v752 = vadd.f32 %v746, %v750
        %v753 = vadd.f32 %v747, %v751
        %s754 = sld [smem:[#allocation2 + $0x4f]]
        %v755 = vstv %s754
        %v756 = vmul.f32 %v755, %v302
        %v757 = vmul.f32 %v755, %v303
        %v758 = vadd.f32 %v752, %v756
        %v759 = vadd.f32 %v753, %v757
        %v760 = vmul.f32 %v758, 0.5
        %v761 = vmul.f32 %v759, 0.5
        %v762 = vtanh.pop %v760
        %v763 = vtanh.pop %v761
        %v764 = vmul.f32 %v762, 0.5
        %v765 = vmul.f32 %v763, 0.5
        %v766 = vadd.f32 %v764, 0.5
        %v767 = vadd.f32 %v765, 0.5
        %s768 = sld [smem:[#allocation2 + $0x58]]
        %v769 = vstv %s768
        %v770 = vmul.f32 %v769, %v360
        %v771 = vmul.f32 %v769, %v361
        %s772 = sld [smem:[#allocation2 + $0x98]]
        %v773 = vstv %s772
        %v774 = vadd.f32 %v770, %v773
        %v775 = vadd.f32 %v771, %v773
        %s776 = sld [smem:[#allocation2 + $0x59]]
        %v777 = vstv %s776
        %v778 = vmul.f32 %v777, %v418
        %v779 = vmul.f32 %v777, %v419
        %v780 = vadd.f32 %v774, %v778
        %v781 = vadd.f32 %v775, %v779
        %s782 = sld [smem:[#allocation2 + $0x5a]]
        %v783 = vstv %s782
        %v784 = vmul.f32 %v783, %v476
        %v785 = vmul.f32 %v783, %v477
        %v786 = vadd.f32 %v780, %v784
        %v787 = vadd.f32 %v781, %v785
        %s788 = sld [smem:[#allocation2 + $0x5b]]
        %v789 = vstv %s788
        %v790 = vmul.f32 %v789, %v534
        %v791 = vmul.f32 %v789, %v535
        %v792 = vadd.f32 %v786, %v790
        %v793 = vadd.f32 %v787, %v791
        %s794 = sld [smem:[#allocation2 + $0x5c]]
        %v795 = vstv %s794
        %v796 = vmul.f32 %v795, %v592
        %v797 = vmul.f32 %v795, %v593
        %v798 = vadd.f32 %v792, %v796
        %v799 = vadd.f32 %v793, %v797
        %s800 = sld [smem:[#allocation2 + $0x5d]]
        %v801 = vstv %s800
        %v802 = vmul.f32 %v801, %v650
        %v803 = vmul.f32 %v801, %v651
        %v804 = vadd.f32 %v798, %v802
        %v805 = vadd.f32 %v799, %v803
        %s806 = sld [smem:[#allocation2 + $0x5e]]
        %v807 = vstv %s806
        %v808 = vmul.f32 %v807, %v708
        %v809 = vmul.f32 %v807, %v709
        %v810 = vadd.f32 %v804, %v808
        %v811 = vadd.f32 %v805, %v809
        %s812 = sld [smem:[#allocation2 + $0x5f]]
        %v813 = vstv %s812
        %v814 = vmul.f32 %v813, %v766
        %v815 = vmul.f32 %v813, %v767
        %v816 = vadd.f32 %v810, %v814
        %v817 = vadd.f32 %v811, %v815
        %v818 = vmul.f32 %v816, 0.5
        %v819 = vmul.f32 %v817, 0.5
        %v820 = vtanh.pop %v818
        %v821 = vtanh.pop %v819
        %v822 = vmul.f32 %v820, 0.5
        %v823 = vmul.f32 %v821, 0.5
        %v824 = vadd.f32 %v822, 0.5
        %v825 = vadd.f32 %v823, 0.5
        %s826 = sld [smem:[#allocation2 + $0x60]]
        %v827 = vstv %s826
        %v828 = vmul.f32 %v827, %v360
        %v829 = vmul.f32 %v827, %v361
        %s830 = sld [smem:[#allocation2 + $0x99]]
        %v831 = vstv %s830
        %v832 = vadd.f32 %v828, %v831
        %v833 = vadd.f32 %v829, %v831
        %s834 = sld [smem:[#allocation2 + $0x61]]
        %v835 = vstv %s834
        %v836 = vmul.f32 %v835, %v418
        %v837 = vmul.f32 %v835, %v419
        %v838 = vadd.f32 %v832, %v836
        %v839 = vadd.f32 %v833, %v837
        %s840 = sld [smem:[#allocation2 + $0x62]]
        %v841 = vstv %s840
        %v842 = vmul.f32 %v841, %v476
        %v843 = vmul.f32 %v841, %v477
        %v844 = vadd.f32 %v838, %v842
        %v845 = vadd.f32 %v839, %v843
        %s846 = sld [smem:[#allocation2 + $0x63]]
        %v847 = vstv %s846
        %v848 = vmul.f32 %v847, %v534
        %v849 = vmul.f32 %v847, %v535
        %v850 = vadd.f32 %v844, %v848
        %v851 = vadd.f32 %v845, %v849
        %s852 = sld [smem:[#allocation2 + $0x64]]
        %v853 = vstv %s852
        %v854 = vmul.f32 %v853, %v592
        %v855 = vmul.f32 %v853, %v593
        %v856 = vadd.f32 %v850, %v854
        %v857 = vadd.f32 %v851, %v855
        %s858 = sld [smem:[#allocation2 + $0x65]]
        %v859 = vstv %s858
        %v860 = vmul.f32 %v859, %v650
        %v861 = vmul.f32 %v859, %v651
        %v862 = vadd.f32 %v856, %v860
        %v863 = vadd.f32 %v857, %v861
        %s864 = sld [smem:[#allocation2 + $0x66]]
        %v865 = vstv %s864
        %v866 = vmul.f32 %v865, %v708
        %v867 = vmul.f32 %v865, %v709
        %v868 = vadd.f32 %v862, %v866
        %v869 = vadd.f32 %v863, %v867
        %s870 = sld [smem:[#allocation2 + $0x67]]
        %v871 = vstv %s870
        %v872 = vmul.f32 %v871, %v766
        %v873 = vmul.f32 %v871, %v767
        %v874 = vadd.f32 %v868, %v872
        %v875 = vadd.f32 %v869, %v873
        %v876 = vmul.f32 %v874, 0.5
        %v877 = vmul.f32 %v875, 0.5
        %v878 = vtanh.pop %v876
        %v879 = vtanh.pop %v877
        %v880 = vmul.f32 %v878, 0.5
        %v881 = vmul.f32 %v879, 0.5
        %v882 = vadd.f32 %v880, 0.5
        %v883 = vadd.f32 %v881, 0.5
        %s884 = sld [smem:[#allocation2 + $0x68]]
        %v885 = vstv %s884
        %v886 = vmul.f32 %v885, %v360
        %v887 = vmul.f32 %v885, %v361
        %s888 = sld [smem:[#allocation2 + $0x9a]]
        %v889 = vstv %s888
        %v890 = vadd.f32 %v886, %v889
        %v891 = vadd.f32 %v887, %v889
        %s892 = sld [smem:[#allocation2 + $0x69]]
        %v893 = vstv %s892
        %v894 = vmul.f32 %v893, %v418
        %v895 = vmul.f32 %v893, %v419
        %v896 = vadd.f32 %v890, %v894
        %v897 = vadd.f32 %v891, %v895
        %s898 = sld [smem:[#allocation2 + $0x6a]]
        %v899 = vstv %s898
        %v900 = vmul.f32 %v899, %v476
        %v901 = vmul.f32 %v899, %v477
        %v902 = vadd.f32 %v896, %v900
        %v903 = vadd.f32 %v897, %v901
        %s904 = sld [smem:[#allocation2 + $0x6b]]
        %v905 = vstv %s904
        %v906 = vmul.f32 %v905, %v534
        %v907 = vmul.f32 %v905, %v535
        %v908 = vadd.f32 %v902, %v906
        %v909 = vadd.f32 %v903, %v907
        %s910 = sld [smem:[#allocation2 + $0x6c]]
        %v911 = vstv %s910
        %v912 = vmul.f32 %v911, %v592
        %v913 = vmul.f32 %v911, %v593
        %v914 = vadd.f32 %v908, %v912
        %v915 = vadd.f32 %v909, %v913
        %s916 = sld [smem:[#allocation2 + $0x6d]]
        %v917 = vstv %s916
        %v918 = vmul.f32 %v917, %v650
        %v919 = vmul.f32 %v917, %v651
        %v920 = vadd.f32 %v914, %v918
        %v921 = vadd.f32 %v915, %v919
        %s922 = sld [smem:[#allocation2 + $0x6e]]
        %v923 = vstv %s922
        %v924 = vmul.f32 %v923, %v708
        %v925 = vmul.f32 %v923, %v709
        %v926 = vadd.f32 %v920, %v924
        %v927 = vadd.f32 %v921, %v925
        %s928 = sld [smem:[#allocation2 + $0x6f]]
        %v929 = vstv %s928
        %v930 = vmul.f32 %v929, %v766
        %v931 = vmul.f32 %v929, %v767
        %v932 = vadd.f32 %v926, %v930
        %v933 = vadd.f32 %v927, %v931
        %v934 = vmul.f32 %v932, 0.5
        %v935 = vmul.f32 %v933, 0.5
        %v936 = vtanh.pop %v934
        %v937 = vtanh.pop %v935
        %v938 = vmul.f32 %v936, 0.5
        %v939 = vmul.f32 %v937, 0.5
        %v940 = vadd.f32 %v938, 0.5
        %v941 = vadd.f32 %v939, 0.5
        %s942 = sld [smem:[#allocation2 + $0x70]]
        %v943 = vstv %s942
        %v944 = vmul.f32 %v943, %v360
        %v945 = vmul.f32 %v943, %v361
        %s946 = sld [smem:[#allocation2 + $0x9b]]
        %v947 = vstv %s946
        %v948 = vadd.f32 %v944, %v947
        %v949 = vadd.f32 %v945, %v947
        %s950 = sld [smem:[#allocation2 + $0x71]]
        %v951 = vstv %s950
        %v952 = vmul.f32 %v951, %v418
        %v953 = vmul.f32 %v951, %v419
        %v954 = vadd.f32 %v948, %v952
        %v955 = vadd.f32 %v949, %v953
        %s956 = sld [smem:[#allocation2 + $0x72]]
        %v957 = vstv %s956
        %v958 = vmul.f32 %v957, %v476
        %v959 = vmul.f32 %v957, %v477
        %v960 = vadd.f32 %v954, %v958
        %v961 = vadd.f32 %v955, %v959
        %s962 = sld [smem:[#allocation2 + $0x73]]
        %v963 = vstv %s962
        %v964 = vmul.f32 %v963, %v534
        %v965 = vmul.f32 %v963, %v535
        %v966 = vadd.f32 %v960, %v964
        %v967 = vadd.f32 %v961, %v965
        %s968 = sld [smem:[#allocation2 + $0x74]]
        %v969 = vstv %s968
        %v970 = vmul.f32 %v969, %v592
        %v971 = vmul.f32 %v969, %v593
        %v972 = vadd.f32 %v966, %v970
        %v973 = vadd.f32 %v967, %v971
        %s974 = sld [smem:[#allocation2 + $0x75]]
        %v975 = vstv %s974
        %v976 = vmul.f32 %v975, %v650
        %v977 = vmul.f32 %v975, %v651
        %v978 = vadd.f32 %v972, %v976
        %v979 = vadd.f32 %v973, %v977
        %s980 = sld [smem:[#allocation2 + $0x76]]
        %v981 = vstv %s980
        %v982 = vmul.f32 %v981, %v708
        %v983 = vmul.f32 %v981, %v709
        %v984 = vadd.f32 %v978, %v982
        %v985 = vadd.f32 %v979, %v983
        %s986 = sld [smem:[#allocation2 + $0x77]]
        %v987 = vstv %s986
        %v988 = vmul.f32 %v987, %v766
        %v989 = vmul.f32 %v987, %v767
        %v990 = vadd.f32 %v984, %v988
        %v991 = vadd.f32 %v985, %v989
        %v992 = vmul.f32 %v990, 0.5
        %v993 = vmul.f32 %v991, 0.5
        %v994 = vtanh.pop %v992
        %v995 = vtanh.pop %v993
        %v996 = vmul.f32 %v994, 0.5
        %v997 = vmul.f32 %v995, 0.5
        %v998 = vadd.f32 %v996, 0.5
        %v999 = vadd.f32 %v997, 0.5
        %s1000 = sld [smem:[#allocation2 + $0x78]]
        %v1001 = vstv %s1000
        %v1002 = vmul.f32 %v1001, %v360
        %v1003 = vmul.f32 %v1001, %v361
        %s1004 = sld [smem:[#allocation2 + $0x9c]]
        %v1005 = vstv %s1004
        %v1006 = vadd.f32 %v1002, %v1005
        %v1007 = vadd.f32 %v1003, %v1005
        %s1008 = sld [smem:[#allocation2 + $0x79]]
        %v1009 = vstv %s1008
        %v1010 = vmul.f32 %v1009, %v418
        %v1011 = vmul.f32 %v1009, %v419
        %v1012 = vadd.f32 %v1006, %v1010
        %v1013 = vadd.f32 %v1007, %v1011
        %s1014 = sld [smem:[#allocation2 + $0x7a]]
        %v1015 = vstv %s1014
        %v1016 = vmul.f32 %v1015, %v476
        %v1017 = vmul.f32 %v1015, %v477
        %v1018 = vadd.f32 %v1012, %v1016
        %v1019 = vadd.f32 %v1013, %v1017
        %s1020 = sld [smem:[#allocation2 + $0x7b]]
        %v1021 = vstv %s1020
        %v1022 = vmul.f32 %v1021, %v534
        %v1023 = vmul.f32 %v1021, %v535
        %v1024 = vadd.f32 %v1018, %v1022
        %v1025 = vadd.f32 %v1019, %v1023
        %s1026 = sld [smem:[#allocation2 + $0x7c]]
        %v1027 = vstv %s1026
        %v1028 = vmul.f32 %v1027, %v592
        %v1029 = vmul.f32 %v1027, %v593
        %v1030 = vadd.f32 %v1024, %v1028
        %v1031 = vadd.f32 %v1025, %v1029
        %s1032 = sld [smem:[#allocation2 + $0x7d]]
        %v1033 = vstv %s1032
        %v1034 = vmul.f32 %v1033, %v650
        %v1035 = vmul.f32 %v1033, %v651
        %v1036 = vadd.f32 %v1030, %v1034
        %v1037 = vadd.f32 %v1031, %v1035
        %s1038 = sld [smem:[#allocation2 + $0x7e]]
        %v1039 = vstv %s1038
        %v1040 = vmul.f32 %v1039, %v708
        %v1041 = vmul.f32 %v1039, %v709
        %v1042 = vadd.f32 %v1036, %v1040
        %v1043 = vadd.f32 %v1037, %v1041
        %s1044 = sld [smem:[#allocation2 + $0x7f]]
        %v1045 = vstv %s1044
        %v1046 = vmul.f32 %v1045, %v766
        %v1047 = vmul.f32 %v1045, %v767
        %v1048 = vadd.f32 %v1042, %v1046
        %v1049 = vadd.f32 %v1043, %v1047
        %v1050 = vmul.f32 %v1048, 0.5
        %v1051 = vmul.f32 %v1049, 0.5
        %v1052 = vtanh.pop %v1050
        %v1053 = vtanh.pop %v1051
        %v1054 = vmul.f32 %v1052, 0.5
        %v1055 = vmul.f32 %v1053, 0.5
        %v1056 = vadd.f32 %v1054, 0.5
        %v1057 = vadd.f32 %v1055, 0.5
        %s1058 = sld [smem:[#allocation2 + $0x80]]
        %v1059 = vstv %s1058
        %v1060 = vmul.f32 %v1059, %v360
        %v1061 = vmul.f32 %v1059, %v361
        %s1062 = sld [smem:[#allocation2 + $0x9d]]
        %v1063 = vstv %s1062
        %v1064 = vadd.f32 %v1060, %v1063
        %v1065 = vadd.f32 %v1061, %v1063
        %s1066 = sld [smem:[#allocation2 + $0x81]]
        %v1067 = vstv %s1066
        %v1068 = vmul.f32 %v1067, %v418
        %v1069 = vmul.f32 %v1067, %v419
        %v1070 = vadd.f32 %v1064, %v1068
        %v1071 = vadd.f32 %v1065, %v1069
        %s1072 = sld [smem:[#allocation2 + $0x82]]
        %v1073 = vstv %s1072
        %v1074 = vmul.f32 %v1073, %v476
        %v1075 = vmul.f32 %v1073, %v477
        %v1076 = vadd.f32 %v1070, %v1074
        %v1077 = vadd.f32 %v1071, %v1075
        %s1078 = sld [smem:[#allocation2 + $0x83]]
        %v1079 = vstv %s1078
        %v1080 = vmul.f32 %v1079, %v534
        %v1081 = vmul.f32 %v1079, %v535
        %v1082 = vadd.f32 %v1076, %v1080
        %v1083 = vadd.f32 %v1077, %v1081
        %s1084 = sld [smem:[#allocation2 + $0x84]]
        %v1085 = vstv %s1084
        %v1086 = vmul.f32 %v1085, %v592
        %v1087 = vmul.f32 %v1085, %v593
        %v1088 = vadd.f32 %v1082, %v1086
        %v1089 = vadd.f32 %v1083, %v1087
        %s1090 = sld [smem:[#allocation2 + $0x85]]
        %v1091 = vstv %s1090
        %v1092 = vmul.f32 %v1091, %v650
        %v1093 = vmul.f32 %v1091, %v651
        %v1094 = vadd.f32 %v1088, %v1092
        %v1095 = vadd.f32 %v1089, %v1093
        %s1096 = sld [smem:[#allocation2 + $0x86]]
        %v1097 = vstv %s1096
        %v1098 = vmul.f32 %v1097, %v708
        %v1099 = vmul.f32 %v1097, %v709
        %v1100 = vadd.f32 %v1094, %v1098
        %v1101 = vadd.f32 %v1095, %v1099
        %s1102 = sld [smem:[#allocation2 + $0x87]]
        %v1103 = vstv %s1102
        %v1104 = vmul.f32 %v1103, %v766
        %v1105 = vmul.f32 %v1103, %v767
        %v1106 = vadd.f32 %v1100, %v1104
        %v1107 = vadd.f32 %v1101, %v1105
        %v1108 = vmul.f32 %v1106, 0.5
        %v1109 = vmul.f32 %v1107, 0.5
        %v1110 = vtanh.pop %v1108
        %v1111 = vtanh.pop %v1109
        %v1112 = vmul.f32 %v1110, 0.5
        %v1113 = vmul.f32 %v1111, 0.5
        %v1114 = vadd.f32 %v1112, 0.5
        %v1115 = vadd.f32 %v1113, 0.5
        %s1116 = sld [smem:[#allocation2 + $0x88]]
        %v1117 = vstv %s1116
        %v1118 = vmul.f32 %v1117, %v360
        %v1119 = vmul.f32 %v1117, %v361
        %s1120 = sld [smem:[#allocation2 + $0x9e]]
        %v1121 = vstv %s1120
        %v1122 = vadd.f32 %v1118, %v1121
        %v1123 = vadd.f32 %v1119, %v1121
        %s1124 = sld [smem:[#allocation2 + $0x89]]
        %v1125 = vstv %s1124
        %v1126 = vmul.f32 %v1125, %v418
        %v1127 = vmul.f32 %v1125, %v419
        %v1128 = vadd.f32 %v1122, %v1126
        %v1129 = vadd.f32 %v1123, %v1127
        %s1130 = sld [smem:[#allocation2 + $0x8a]]
        %v1131 = vstv %s1130
        %v1132 = vmul.f32 %v1131, %v476
        %v1133 = vmul.f32 %v1131, %v477
        %v1134 = vadd.f32 %v1128, %v1132
        %v1135 = vadd.f32 %v1129, %v1133
        %s1136 = sld [smem:[#allocation2 + $0x8b]]
        %v1137 = vstv %s1136
        %v1138 = vmul.f32 %v1137, %v534
        %v1139 = vmul.f32 %v1137, %v535
        %v1140 = vadd.f32 %v1134, %v1138
        %v1141 = vadd.f32 %v1135, %v1139
        %s1142 = sld [smem:[#allocation2 + $0x8c]]
        %v1143 = vstv %s1142
        %v1144 = vmul.f32 %v1143, %v592
        %v1145 = vmul.f32 %v1143, %v593
        %v1146 = vadd.f32 %v1140, %v1144
        %v1147 = vadd.f32 %v1141, %v1145
        %s1148 = sld [smem:[#allocation2 + $0x8d]]
        %v1149 = vstv %s1148
        %v1150 = vmul.f32 %v1149, %v650
        %v1151 = vmul.f32 %v1149, %v651
        %v1152 = vadd.f32 %v1146, %v1150
        %v1153 = vadd.f32 %v1147, %v1151
        %s1154 = sld [smem:[#allocation2 + $0x8e]]
        %v1155 = vstv %s1154
        %v1156 = vmul.f32 %v1155, %v708
        %v1157 = vmul.f32 %v1155, %v709
        %v1158 = vadd.f32 %v1152, %v1156
        %v1159 = vadd.f32 %v1153, %v1157
        %s1160 = sld [smem:[#allocation2 + $0x8f]]
        %v1161 = vstv %s1160
        %v1162 = vmul.f32 %v1161, %v766
        %v1163 = vmul.f32 %v1161, %v767
        %v1164 = vadd.f32 %v1158, %v1162
        %v1165 = vadd.f32 %v1159, %v1163
        %v1166 = vmul.f32 %v1164, 0.5
        %v1167 = vmul.f32 %v1165, 0.5
        %v1168 = vtanh.pop %v1166
        %v1169 = vtanh.pop %v1167
        %v1170 = vmul.f32 %v1168, 0.5
        %v1171 = vmul.f32 %v1169, 0.5
        %v1172 = vadd.f32 %v1170, 0.5
        %v1173 = vadd.f32 %v1171, 0.5
        %s1174 = sld [smem:[#allocation2 + $0x90]]
        %v1175 = vstv %s1174
        %v1176 = vmul.f32 %v1175, %v360
        %v1177 = vmul.f32 %v1175, %v361
        %s1178 = sld [smem:[#allocation2 + $0x9f]]
        %v1179 = vstv %s1178
        %v1180 = vadd.f32 %v1176, %v1179
        %v1181 = vadd.f32 %v1177, %v1179
        %s1182 = sld [smem:[#allocation2 + $0x91]]
        %v1183 = vstv %s1182
        %v1184 = vmul.f32 %v1183, %v418
        %v1185 = vmul.f32 %v1183, %v419
        %v1186 = vadd.f32 %v1180, %v1184
        %v1187 = vadd.f32 %v1181, %v1185
        %s1188 = sld [smem:[#allocation2 + $0x92]]
        %v1189 = vstv %s1188
        %v1190 = vmul.f32 %v1189, %v476
        %v1191 = vmul.f32 %v1189, %v477
        %v1192 = vadd.f32 %v1186, %v1190
        %v1193 = vadd.f32 %v1187, %v1191
        %s1194 = sld [smem:[#allocation2 + $0x93]]
        %v1195 = vstv %s1194
        %v1196 = vmul.f32 %v1195, %v534
        %v1197 = vmul.f32 %v1195, %v535
        %v1198 = vadd.f32 %v1192, %v1196
        %v1199 = vadd.f32 %v1193, %v1197
        %s1200 = sld [smem:[#allocation2 + $0x94]]
        %v1201 = vstv %s1200
        %v1202 = vmul.f32 %v1201, %v592
        %v1203 = vmul.f32 %v1201, %v593
        %v1204 = vadd.f32 %v1198, %v1202
        %v1205 = vadd.f32 %v1199, %v1203
        %s1206 = sld [smem:[#allocation2 + $0x95]]
        %v1207 = vstv %s1206
        %v1208 = vmul.f32 %v1207, %v650
        %v1209 = vmul.f32 %v1207, %v651
        %v1210 = vadd.f32 %v1204, %v1208
        %v1211 = vadd.f32 %v1205, %v1209
        %s1212 = sld [smem:[#allocation2 + $0x96]]
        %v1213 = vstv %s1212
        %v1214 = vmul.f32 %v1213, %v708
        %v1215 = vmul.f32 %v1213, %v709
        %v1216 = vadd.f32 %v1210, %v1214
        %v1217 = vadd.f32 %v1211, %v1215
        %s1218 = sld [smem:[#allocation2 + $0x97]]
        %v1219 = vstv %s1218
        %v1220 = vmul.f32 %v1219, %v766
        %v1221 = vmul.f32 %v1219, %v767
        %v1222 = vadd.f32 %v1216, %v1220
        %v1223 = vadd.f32 %v1217, %v1221
        %v1224 = vmul.f32 %v1222, 0.5
        %v1225 = vmul.f32 %v1223, 0.5
        %v1226 = vtanh.pop %v1224
        %v1227 = vtanh.pop %v1225
        %v1228 = vmul.f32 %v1226, 0.5
        %v1229 = vmul.f32 %v1227, 0.5
        %v1230 = vadd.f32 %v1228, 0.5
        %v1231 = vadd.f32 %v1229, 0.5
        %s1232 = sld [smem:[#allocation2 + $0xa0]]
        %v1233 = vstv %s1232
        %v1234 = vmul.f32 %v1233, %v824
        %v1235 = vmul.f32 %v1233, %v825
        %s1236 = sld [smem:[#allocation2 + $0xa8]]
        %v1237 = vstv %s1236
        %v1238 = vadd.f32 %v1234, %v1237
        %v1239 = vadd.f32 %v1235, %v1237
        %s1240 = sld [smem:[#allocation2 + $0xa1]]
        %v1241 = vstv %s1240
        %v1242 = vmul.f32 %v1241, %v882
        %v1243 = vmul.f32 %v1241, %v883
        %v1244 = vadd.f32 %v1238, %v1242
        %v1245 = vadd.f32 %v1239, %v1243
        %s1246 = sld [smem:[#allocation2 + $0xa2]]
        %v1247 = vstv %s1246
        %v1248 = vmul.f32 %v1247, %v940
        %v1249 = vmul.f32 %v1247, %v941
        %v1250 = vadd.f32 %v1244, %v1248
        %v1251 = vadd.f32 %v1245, %v1249
        %s1252 = sld [smem:[#allocation2 + $0xa3]]
        %v1253 = vstv %s1252
        %v1254 = vmul.f32 %v1253, %v998
        %v1255 = vmul.f32 %v1253, %v999
        %v1256 = vadd.f32 %v1250, %v1254
        %v1257 = vadd.f32 %v1251, %v1255
        %s1258 = sld [smem:[#allocation2 + $0xa4]]
        %v1259 = vstv %s1258
        %v1260 = vmul.f32 %v1259, %v1056
        %v1261 = vmul.f32 %v1259, %v1057
        %v1262 = vadd.f32 %v1256, %v1260
        %v1263 = vadd.f32 %v1257, %v1261
        %s1264 = sld [smem:[#allocation2 + $0xa5]]
        %v1265 = vstv %s1264
        %v1266 = vmul.f32 %v1265, %v1114
        %v1267 = vmul.f32 %v1265, %v1115
        %v1268 = vadd.f32 %v1262, %v1266
        %v1269 = vadd.f32 %v1263, %v1267
        %s1270 = sld [smem:[#allocation2 + $0xa6]]
        %v1271 = vstv %s1270
        %v1272 = vmul.f32 %v1271, %v1172
        %v1273 = vmul.f32 %v1271, %v1173
        %v1274 = vadd.f32 %v1268, %v1272
        %v1275 = vadd.f32 %v1269, %v1273
        %s1276 = sld [smem:[#allocation2 + $0xa7]]
        %v1277 = vstv %s1276
        %v1278 = vmul.f32 %v1277, %v1230
        %v1279 = vmul.f32 %v1277, %v1231
        %v1280 = vadd.f32 %v1274, %v1278
        %v1281 = vadd.f32 %v1275, %v1279
        %v1282 = vmul.f32 %v1280, 0.5
        %v1283 = vmul.f32 %v1281, 0.5
        %v1284 = vtanh.pop %v1282
        %v1285 = vtanh.pop %v1283
        %v1286 = vmul.f32 %v1284, 0.5
        %v1287 = vmul.f32 %v1285, 0.5
        %v1288 = vadd.f32 %v1286, 0.5
        %v1289 = vadd.f32 %v1287, 0.5
        %1290 = vst [vmem:[%s171] sm:$0xff] %v1288
        %1291 = vst [vmem:[%s171 + $0x8] sm:$0xff] %v1289
        %s1292 = sand.u32 %s75, 1
        %s1293 = scalar_lea.sflag [#allocation4], %s1292
        %s1294 = sand.u32 %s75, 1
        %s1295 = smul.addr %s1294, 16
        %s1296 = scalar_lea.vmem [#allocation7], %s1295
        // Predicated region
        $region37: #{tpu_custom_call.1} parent=27 // pred_check
          %p1297 = pneg %p85
        $region38: #{tpu_custom_call.1} parent=27 // pred_check_branch
          %1299 = sbr.rel (%p1297) target = $region40
        $region39: #{tpu_custom_call.1} parent=27 // pred_region
          %s1300 = smul.u32 2, %s20
          %s1302 = ssub.s32 256, 256
          %1303 = vsyncadd %s1293, %s1302
          %s1304 = smul.addr %s1300, 128
          %s1305 = scalar_lea.hbm %s2, %s1304
          %s1307 = sshll.u32 %s1296, 4
          %s1308 = int_to_ptr.vmem [resolvable:$true] %s1307
          %1310 = dma.vmem_to_hbm [thread:$0]  %s1308, 256, %s1305, %s1293
        $region40: #{tpu_custom_call.1} parent=27 // pred_fallthru
          _
      $region28: #{tpu_custom_call.1} parent=5 // pred_fallthru
        _
      %p1311 = scmp.le.s32.totalorder 2, %s15
      // Predicated region
      $region41: #{tpu_custom_call.1} parent=5 // pred_check
        %p1312 = pneg %p1311
      $region42: #{tpu_custom_call.1} parent=5 // pred_check_branch
        %1314 = sbr.rel (%p1312) target = $region44
      $region43: #{tpu_custom_call.1} parent=5 // pred_region
        %s1315 = ssub.s32 %s15, 2
        // Predicated region
        $region45: #{tpu_custom_call.1} parent=43 // pred_check
          %p1316 = pneg %p91
        $region46: #{tpu_custom_call.1} parent=43 // pred_check_branch
          %1318 = sbr.rel (%p1316) target = $region48
        $region47: #{tpu_custom_call.1} parent=43 // pred_region
          %s1319 = sand.u32 %s76, 1
          %s1320 = scalar_lea.sflag [#allocation4], %s1319
          %s1321 = sand.u32 %s76, 1
          %s1322 = smul.addr %s1321, 16
          %s1323 = scalar_lea.vmem [#allocation7], %s1322
          %1324 = dma.done %s1320, 256
        $region48: #{tpu_custom_call.1} parent=43 // pred_fallthru
          _
      $region44: #{tpu_custom_call.1} parent=5 // pred_fallthru
        _
    $region6: #{tpu_custom_call.1} parent=1 // loop_footer
      %s19 = sadd.s32 1, %s15
    $region7: #{tpu_custom_call.1} parent=1 // loop_footer_branch
      %14 = sbr.rel target = $region3
    $region8: #{tpu_custom_call.1} parent=1 // loop_exit
      _
    %1325 = vsyncpa [#allocation3], 1
    %s1326 = scalar_lea.sflag [#allocation3], 1
    %1327 = vsyncpa %s1326, 1
    %1328 = vsyncpa [#allocation4], 1
    %s1329 = scalar_lea.sflag [#allocation4], 1
    %1330 = vsyncpa %s1329, 1
    %1331 = vsyncpa [#allocation5], 1
    %s1332 = scalar_lea.sflag [#allocation5], 1
    %1333 = vsyncpa %s1332, 1

</llo_original>
